<compile_context>
chip_gen: v7x
topology: tpu7x:2x2x1
jax: 0.10.0
libtpu: 0.0.40
codegen_flags: <defaults>
</compile_context>

<pallas_src>
import jax
import jax.numpy as jnp
from jax.experimental import pallas as pl
from jax.experimental.pallas import tpu as pltpu

_EPS = 1e-5  # torch.nn.LayerNorm default eps


def _layernorm(x, w, b):
    mu = jnp.mean(x, axis=-1, keepdims=True)
    var = jnp.mean(jnp.square(x - mu), axis=-1, keepdims=True)
    return (x - mu) * jax.lax.rsqrt(var + _EPS) * w + b


def _gelu(x):
    # exact (erf-based) GELU, matching torch.nn.GELU() default
    return 0.5 * x * (1.0 + jax.lax.erf(x / jnp.sqrt(2.0).astype(x.dtype)))


def mixer_block_kernel(adj_ref, x_ref, dvec_ref,
                       w1t_ref, b1_ref, w2t_ref, b2_ref,
                       cw1_ref, cb1_ref, cw2_ref,
                       out_ref, x1_ref):
    Bblk, N, _ = adj_ref.shape          # adj block: (Bblk, N, N)
    D = x_ref.shape[-1]                 # x block:   (Bblk*N, D)

    # Packed D-length vectors: [ln1_w, ln1_b, ln2_w, ln2_b, cb2]
    ln1_w = dvec_ref[0]
    ln1_b = dvec_ref[1]
    ln2_w = dvec_ref[2]
    ln2_b = dvec_ref[3]
    cb2 = dvec_ref[4]

    w1t = w1t_ref[...]                  # (T, N)  torch orientation
    w2t = w2t_ref[...]                  # (N, T)  torch orientation
    T = w1t.shape[0]
    cdt = w1t.dtype                     # matmul operand dtype (bf16 lever on v6e/v7x)

    def mm(a, b):
        return jnp.dot(a.astype(cdt), b.astype(cdt),
                       preferred_element_type=jnp.float32)

    # Hoist broadcasts out of the per-batch loop.
    b1f = jnp.broadcast_to(b1_ref[...], (T, D))     # token FFN bias 1 over D columns
    b2f = jnp.broadcast_to(b2_ref[...], (N, D))     # token FFN bias 2 over D columns
    lw1 = jnp.broadcast_to(ln1_w, (N, D))
    lb1 = jnp.broadcast_to(ln1_b, (N, D))

    # ---- token mix per batch element (transposed formulation, no transposes);
    #      x1 = x + token_mix written straight into the VMEM scratch slab ----
    for b in range(Bblk):                               # static, unrolled
        xb = x_ref[b * N:(b + 1) * N, :].astype(jnp.float32)   # (N, D)
        ax = mm(adj_ref[b], xb)                          # coarsen_adj @ x     (N, D)
        axn = _layernorm(ax, lw1, lb1)                   # LayerNorm over D    (N, D)
        hT = _gelu(mm(w1t, axn) + b1f)                   # W1 @ axn + b1       (T, D)
        x1_ref[b * N:(b + 1) * N, :] = xb + mm(w2t, hT) + b2f   # residual     (N, D)

    # ---- channel mix on the whole flattened block: one (Bblk*N, D) FFN ----
    x1 = x1_ref[...]                                     # (Bblk*N, D) f32
    x1n = _layernorm(x1, ln2_w, ln2_b)
    h2 = _gelu(mm(x1n, cw1_ref[...]) + cb1_ref[...])     # (Bblk*N, C)
    cmix = mm(h2, cw2_ref[...]) + cb2                    # (Bblk*N, D)

    out_ref[...] = (x1 + cmix).astype(out_ref.dtype)


def _auto_batch_block(B, N, D, C, vmem_budget_bytes=8 * 1024 * 1024):
    """Largest divisor of B that keeps >=2 grid steps (v7x dual TC) and fits VMEM."""
    if B <= 1:
        return max(B, 1)
    cand = max(1, B // 2)
    while cand > 1 and B % cand != 0:
        cand -= 1

    def block_bytes(bb):
        # rough f32 estimate: double-buffered x & out blocks + x1 scratch
        # + h2 intermediate + adj block
        return 4 * (2 * 2 * bb * N * D + bb * N * D + bb * N * C + bb * N * N)

    while cand > 1 and block_bytes(cand) > vmem_budget_bytes:
        cand -= 1
        while cand > 1 and B % cand != 0:
            cand -= 1
    return cand


def mixer_block(x, coarsen_adj, params, *, batch_block=None):
    B, N, D = x.shape
    T = params["tw1"].shape[1]          # token_dim
    C = params["cw1"].shape[1]          # channel_dim

    if coarsen_adj is None:             # module allows None -> a_x = x
        coarsen_adj = jnp.broadcast_to(jnp.eye(N, dtype=x.dtype), (B, N, N))

    if batch_block is None:
        batch_block = _auto_batch_block(B, N, D, C)
    if B % batch_block != 0:
        raise ValueError(f"batch_block {batch_block} must divide B={B}")
    Bblk = batch_block
    grid = (B // Bblk,)

    # --- one-time wrapper-side parameter packing (outside the kernel) ---
    # five (1, D) vectors -> one (5, D) array: ln1_w, ln1_b, ln2_w, ln2_b, cb2
    dvecs = jnp.concatenate([params["ln1_w"], params["ln1_b"],
                             params["ln2_w"], params["ln2_b"],
                             params["cb2"]], axis=0)
    w1t = params["tw1"].T               # (T, N)  torch orientation -> left-multiply
    w2t = params["tw2"].T               # (N, T)
    b1c = params["tb1"].reshape(T, 1)   # column vectors broadcast over D lanes
    b2c = params["tb2"].reshape(N, 1)

    x_flat = x.reshape(B * N, D)        # free: row-major (B, N, D) == (B*N, D)

    full = lambda shape: pl.BlockSpec(shape, lambda b: (0,) * len(shape))

    out = pl.pallas_call(
        mixer_block_kernel,
        out_shape=jax.ShapeDtypeStruct((B * N, D), x.dtype),
        grid_spec=pltpu.PrefetchScalarGridSpec(
            num_scalar_prefetch=0,
            grid=grid,
            in_specs=[
                pl.BlockSpec((Bblk, N, N), lambda b: (b, 0, 0)),   # coarsen_adj
                pl.BlockSpec((Bblk * N, D), lambda b: (b, 0)),     # x (flattened rows)
                full((5, D)),                                      # packed D-vectors
                full((T, N)),                                      # token W1 (torch orient)
                full((T, 1)),                                      # token b1 (column)
                full((N, T)),                                      # token W2 (torch orient)
                full((N, 1)),                                      # token b2 (column)
                full((D, C)),                                      # channel W1
                full((1, C)),                                      # channel b1
                full((C, D)),                                      # channel W2
            ],
            out_specs=pl.BlockSpec((Bblk * N, D), lambda b: (b, 0)),
            scratch_shapes=[pltpu.VMEM((Bblk * N, D), jnp.float32)],  # x1 slab
        ),
        compiler_params=pltpu.CompilerParams(
            dimension_semantics=("parallel",)),
    )(coarsen_adj, x_flat, dvecs, w1t, b1c, w2t, b2c,
      params["cw1"], params["cb1"], params["cw2"])

    return out.reshape(B, N, D)


def mixer_block_reference(x, coarsen_adj, params):
    """Plain-JAX reference matching the PyTorch forward."""
    ax = jnp.einsum("bnm,bmd->bnd", coarsen_adj, x)
    ax_n = _layernorm(ax, params["ln1_w"][0], params["ln1_b"][0])
    t = jnp.swapaxes(ax_n, 1, 2)                                       # (B, D, N)
    h = _gelu(jnp.einsum("bdn,nt->bdt", t, params["tw1"]) + params["tb1"][0])
    tmix = jnp.einsum("bdt,tn->bdn", h, params["tw2"]) + params["tb2"][0]
    x1 = x + jnp.swapaxes(tmix, 1, 2)
    x1_n = _layernorm(x1, params["ln2_w"][0], params["ln2_b"][0])
    h2 = _gelu(jnp.einsum("bnd,dc->bnc", x1_n, params["cw1"]) + params["cb1"][0])
    cmix = jnp.einsum("bnc,cd->bnd", h2, params["cw2"]) + params["cb2"][0]
    return x1 + cmix


if __name__ == "__main__":
    B = 4          # batch  (grid = 2 steps of 2 batch elements each)
    N = 16         # num_patch
    D = 64         # dim
    token_dim = 32
    channel_dim = 128

    key = jax.random.PRNGKey(0)
    kx, kadj, kp = jax.random.split(key, 3)
    x = jax.random.normal(kx, (B, N, D), jnp.float32)
    coarsen_adj = jax.random.normal(kadj, (B, N, N), jnp.float32) * 0.1

    keys = jax.random.split(kp, 8)
    scale = 0.05
    params = {
        # LayerNorm params at PyTorch default init (ones / zeros)
        "ln1_w": jnp.ones((1, D), jnp.float32),
        "ln1_b": jnp.zeros((1, D), jnp.float32),
        "ln2_w": jnp.ones((1, D), jnp.float32),
        "ln2_b": jnp.zeros((1, D), jnp.float32),
        # token-mix FeedForward: Linear(N -> token_dim), Linear(token_dim -> N)
        # stored as (in, out); the wrapper flips back to torch orientation.
        "tw1": (jax.random.normal(keys[0], (N, token_dim)) * scale).astype(jnp.float32),
        "tb1": (jax.random.normal(keys[1], (1, token_dim)) * scale).astype(jnp.float32),
        "tw2": (jax.random.normal(keys[2], (token_dim, N)) * scale).astype(jnp.float32),
        "tb2": (jax.random.normal(keys[3], (1, N)) * scale).astype(jnp.float32),
        # channel-mix FeedForward: Linear(D -> channel_dim), Linear(channel_dim -> D)
        "cw1": (jax.random.normal(keys[4], (D, channel_dim)) * scale).astype(jnp.float32),
        "cb1": (jax.random.normal(keys[5], (1, channel_dim)) * scale).astype(jnp.float32),
        "cw2": (jax.random.normal(keys[6], (channel_dim, D)) * scale).astype(jnp.float32),
        "cb2": (jax.random.normal(keys[7], (1, D)) * scale).astype(jnp.float32),
    }

    out = jax.jit(mixer_block)(x, coarsen_adj, params)
    jax.block_until_ready(out)

    ref = mixer_block_reference(x, coarsen_adj, params)
    assert out.shape == (B, N, D) and out.dtype == jnp.float32
    assert jnp.allclose(out, ref, atol=1e-4, rtol=1e-4), float(jnp.max(jnp.abs(out - ref)))
    print("KERNEL_OK")
</pallas_src>

<mosaic_0001>
module attributes {stable_mosaic.version = 11 : i64} {
  func.func @mixer_block_kernel(%arg0: i32, %arg1: memref<2x16x16xf32, #tpu.memory_space<vmem>>, %arg2: memref<32x64xf32, #tpu.memory_space<vmem>>, %arg3: memref<5x64xf32, #tpu.memory_space<vmem>>, %arg4: memref<32x16xf32, #tpu.memory_space<vmem>>, %arg5: memref<32x1xf32, #tpu.memory_space<vmem>>, %arg6: memref<16x32xf32, #tpu.memory_space<vmem>>, %arg7: memref<16x1xf32, #tpu.memory_space<vmem>>, %arg8: memref<64x128xf32, #tpu.memory_space<vmem>>, %arg9: memref<1x128xf32, #tpu.memory_space<vmem>>, %arg10: memref<128x64xf32, #tpu.memory_space<vmem>>, %arg11: memref<32x64xf32, #tpu.memory_space<vmem>>, %arg12: memref<32x64xf32, #tpu.memory_space<vmem>>) attributes {dimension_semantics = [#tpu.dimension_semantics<parallel>], iteration_bounds = array<i64: 2>, scalar_prefetch = 0 : i64, scratch_operands = 1 : i64, tpu.core_type = #tpu.core_type<tc>, window_params = [{transform_indices = @transform_0, window_bounds = array<i64: 2, 16, 16>}, {transform_indices = @transform_1, window_bounds = array<i64: 32, 64>}, {pipeline_mode = #tpu.pipeline_mode<synchronous>, transform_indices = @transform_2, window_bounds = array<i64: 5, 64>}, {pipeline_mode = #tpu.pipeline_mode<synchronous>, transform_indices = @transform_3, window_bounds = array<i64: 32, 16>}, {pipeline_mode = #tpu.pipeline_mode<synchronous>, transform_indices = @transform_4, window_bounds = array<i64: 32, 1>}, {pipeline_mode = #tpu.pipeline_mode<synchronous>, transform_indices = @transform_5, window_bounds = array<i64: 16, 32>}, {pipeline_mode = #tpu.pipeline_mode<synchronous>, transform_indices = @transform_6, window_bounds = array<i64: 16, 1>}, {pipeline_mode = #tpu.pipeline_mode<synchronous>, transform_indices = @transform_7, window_bounds = array<i64: 64, 128>}, {pipeline_mode = #tpu.pipeline_mode<synchronous>, transform_indices = @transform_8, window_bounds = array<i64: 1, 128>}, {pipeline_mode = #tpu.pipeline_mode<synchronous>, transform_indices = @transform_9, window_bounds = array<i64: 128, 64>}, {transform_indices = @transform_10, window_bounds = array<i64: 32, 64>}]} {
    %c0 = arith.constant 0 : index
    %c0_0 = arith.constant 0 : index
    %0 = vector.load %arg3[%c0, %c0_0] : memref<5x64xf32, #tpu.memory_space<vmem>>, vector<1x64xf32>
    %1 = vector.shape_cast %0 : vector<1x64xf32> to vector<64xf32>
    %c1 = arith.constant 1 : index
    %c0_1 = arith.constant 0 : index
    %2 = vector.load %arg3[%c1, %c0_1] : memref<5x64xf32, #tpu.memory_space<vmem>>, vector<1x64xf32>
    %3 = vector.shape_cast %2 : vector<1x64xf32> to vector<64xf32>
    %c2 = arith.constant 2 : index
    %c0_2 = arith.constant 0 : index
    %4 = vector.load %arg3[%c2, %c0_2] : memref<5x64xf32, #tpu.memory_space<vmem>>, vector<1x64xf32>
    %5 = vector.shape_cast %4 : vector<1x64xf32> to vector<64xf32>
    %c3 = arith.constant 3 : index
    %c0_3 = arith.constant 0 : index
    %6 = vector.load %arg3[%c3, %c0_3] : memref<5x64xf32, #tpu.memory_space<vmem>>, vector<1x64xf32>
    %7 = vector.shape_cast %6 : vector<1x64xf32> to vector<64xf32>
    %c4 = arith.constant 4 : index
    %c0_4 = arith.constant 0 : index
    %8 = vector.load %arg3[%c4, %c0_4] : memref<5x64xf32, #tpu.memory_space<vmem>>, vector<1x64xf32>
    %9 = vector.shape_cast %8 : vector<1x64xf32> to vector<64xf32>
    %c0_5 = arith.constant 0 : index
    %c0_6 = arith.constant 0 : index
    %10 = vector.load %arg4[%c0_5, %c0_6] : memref<32x16xf32, #tpu.memory_space<vmem>>, vector<32x16xf32>
    %c0_7 = arith.constant 0 : index
    %c0_8 = arith.constant 0 : index
    %11 = vector.load %arg6[%c0_7, %c0_8] : memref<16x32xf32, #tpu.memory_space<vmem>>, vector<16x32xf32>
    %c0_9 = arith.constant 0 : index
    %c0_10 = arith.constant 0 : index
    %12 = vector.load %arg5[%c0_9, %c0_10] : memref<32x1xf32, #tpu.memory_space<vmem>>, vector<32x1xf32>
    %13 = vector.shape_cast %12 : vector<32x1xf32> to vector<32x1xf32>
    %14 = vector.broadcast %13 : vector<32x1xf32> to vector<32x64xf32>
    %c0_11 = arith.constant 0 : index
    %c0_12 = arith.constant 0 : index
    %15 = vector.load %arg7[%c0_11, %c0_12] : memref<16x1xf32, #tpu.memory_space<vmem>>, vector<16x1xf32>
    %16 = vector.shape_cast %15 : vector<16x1xf32> to vector<16x1xf32>
    %17 = vector.broadcast %16 : vector<16x1xf32> to vector<16x64xf32>
    %18 = vector.shape_cast %1 : vector<64xf32> to vector<1x64xf32>
    %19 = vector.broadcast %18 : vector<1x64xf32> to vector<16x64xf32>
    %20 = vector.shape_cast %3 : vector<64xf32> to vector<1x64xf32>
    %21 = vector.broadcast %20 : vector<1x64xf32> to vector<16x64xf32>
    %c0_13 = arith.constant 0 : index
    %c0_14 = arith.constant 0 : index
    %22 = vector.load %arg2[%c0_13, %c0_14] : memref<32x64xf32, #tpu.memory_space<vmem>>, vector<16x64xf32>
    %c0_15 = arith.constant 0 : index
    %c0_16 = arith.constant 0 : index
    %c0_17 = arith.constant 0 : index
    %23 = vector.load %arg1[%c0_15, %c0_16, %c0_17] : memref<2x16x16xf32, #tpu.memory_space<vmem>>, vector<1x16x16xf32>
    %24 = vector.shape_cast %23 : vector<1x16x16xf32> to vector<16x16xf32>
    %cst = arith.constant dense<0.000000e+00> : vector<16x64xf32>
    %25 = tpu.matmul %24, %22, %cst {dimension_numbers = #tpu.dot_dimension_numbers<[1], [0], [0], [1], [0, 0, 1, 1], [], []>} : vector<16x16xf32>, vector<16x64xf32>, vector<16x64xf32> -> vector<16x64xf32>
    %cst_18 = arith.constant dense<0.000000e+00> : vector<16xf32>
    %26 = vector.multi_reduction <add>, %25, %cst_18 [1] : vector<16x64xf32> to vector<16xf32>
    %27 = vector.shape_cast %26 : vector<16xf32> to vector<16x1xf32>
    %cst_19 = arith.constant 6.400000e+01 : f32
    %28 = vector.broadcast %cst_19 : f32 to vector<16x1xf32>
    %29 = arith.divf %27, %28 : vector<16x1xf32>
    %30 = vector.broadcast %29 : vector<16x1xf32> to vector<16x64xf32>
    %31 = arith.subf %25, %30 : vector<16x64xf32>
    %32 = arith.mulf %31, %31 : vector<16x64xf32>
    %cst_20 = arith.constant dense<0.000000e+00> : vector<16xf32>
    %33 = vector.multi_reduction <add>, %32, %cst_20 [1] : vector<16x64xf32> to vector<16xf32>
    %34 = vector.shape_cast %33 : vector<16xf32> to vector<16x1xf32>
    %cst_21 = arith.constant 6.400000e+01 : f32
    %35 = vector.broadcast %cst_21 : f32 to vector<16x1xf32>
    %36 = arith.divf %34, %35 : vector<16x1xf32>
    %37 = vector.broadcast %29 : vector<16x1xf32> to vector<16x64xf32>
    %38 = arith.subf %25, %37 : vector<16x64xf32>
    %cst_22 = arith.constant 9.99999974E-6 : f32
    %39 = vector.broadcast %cst_22 : f32 to vector<16x1xf32>
    %40 = arith.addf %36, %39 : vector<16x1xf32>
    %41 = math.rsqrt %40 : vector<16x1xf32>
    %42 = vector.broadcast %41 : vector<16x1xf32> to vector<16x64xf32>
    %43 = arith.mulf %38, %42 : vector<16x64xf32>
    %44 = arith.mulf %43, %19 : vector<16x64xf32>
    %45 = arith.addf %44, %21 : vector<16x64xf32>
    %cst_23 = arith.constant dense<0.000000e+00> : vector<32x64xf32>
    %46 = tpu.matmul %10, %45, %cst_23 {dimension_numbers = #tpu.dot_dimension_numbers<[1], [0], [0], [1], [0, 0, 1, 1], [], []>} : vector<32x16xf32>, vector<16x64xf32>, vector<32x64xf32> -> vector<32x64xf32>
    %47 = arith.addf %46, %14 : vector<32x64xf32>
    %cst_24 = arith.constant 5.000000e-01 : f32
    %48 = vector.broadcast %cst_24 : f32 to vector<32x64xf32>
    %49 = arith.mulf %48, %47 : vector<32x64xf32>
    %cst_25 = arith.constant 2.000000e+00 : f32
    %50 = math.sqrt %cst_25 : f32
    %51 = vector.broadcast %50 : f32 to vector<32x64xf32>
    %52 = arith.divf %47, %51 : vector<32x64xf32>
    %53 = math.erf %52 : vector<32x64xf32>
    %cst_26 = arith.constant 1.000000e+00 : f32
    %54 = vector.broadcast %cst_26 : f32 to vector<32x64xf32>
    %55 = arith.addf %54, %53 : vector<32x64xf32>
    %56 = arith.mulf %49, %55 : vector<32x64xf32>
    %cst_27 = arith.constant dense<0.000000e+00> : vector<16x64xf32>
    %57 = tpu.matmul %11, %56, %cst_27 {dimension_numbers = #tpu.dot_dimension_numbers<[1], [0], [0], [1], [0, 0, 1, 1], [], []>} : vector<16x32xf32>, vector<32x64xf32>, vector<16x64xf32> -> vector<16x64xf32>
    %58 = arith.addf %22, %57 : vector<16x64xf32>
    %59 = arith.addf %58, %17 : vector<16x64xf32>
    %c0_28 = arith.constant 0 : index
    %c0_29 = arith.constant 0 : index
    %60 = vector.load %arg12[%c0_28, %c0_29] : memref<32x64xf32, #tpu.memory_space<vmem>>, vector<16x64xf32>
    tpu.vector_store %arg12[%c0_28, %c0_29], %59 {strides = array<i32>} : memref<32x64xf32, #tpu.memory_space<vmem>>, vector<16x64xf32>,
    %c16 = arith.constant 16 : index
    %c0_30 = arith.constant 0 : index
    %61 = vector.load %arg2[%c16, %c0_30] : memref<32x64xf32, #tpu.memory_space<vmem>>, vector<16x64xf32>
    %c1_31 = arith.constant 1 : index
    %c0_32 = arith.constant 0 : index
    %c0_33 = arith.constant 0 : index
    %62 = vector.load %arg1[%c1_31, %c0_32, %c0_33] : memref<2x16x16xf32, #tpu.memory_space<vmem>>, vector<1x16x16xf32>
    %63 = vector.shape_cast %62 : vector<1x16x16xf32> to vector<16x16xf32>
    %cst_34 = arith.constant dense<0.000000e+00> : vector<16x64xf32>
    %64 = tpu.matmul %63, %61, %cst_34 {dimension_numbers = #tpu.dot_dimension_numbers<[1], [0], [0], [1], [0, 0, 1, 1], [], []>} : vector<16x16xf32>, vector<16x64xf32>, vector<16x64xf32> -> vector<16x64xf32>
    %cst_35 = arith.constant dense<0.000000e+00> : vector<16xf32>
    %65 = vector.multi_reduction <add>, %64, %cst_35 [1] : vector<16x64xf32> to vector<16xf32>
    %66 = vector.shape_cast %65 : vector<16xf32> to vector<16x1xf32>
    %cst_36 = arith.constant 6.400000e+01 : f32
    %67 = vector.broadcast %cst_36 : f32 to vector<16x1xf32>
    %68 = arith.divf %66, %67 : vector<16x1xf32>
    %69 = vector.broadcast %68 : vector<16x1xf32> to vector<16x64xf32>
    %70 = arith.subf %64, %69 : vector<16x64xf32>
    %71 = arith.mulf %70, %70 : vector<16x64xf32>
    %cst_37 = arith.constant dense<0.000000e+00> : vector<16xf32>
    %72 = vector.multi_reduction <add>, %71, %cst_37 [1] : vector<16x64xf32> to vector<16xf32>
    %73 = vector.shape_cast %72 : vector<16xf32> to vector<16x1xf32>
    %cst_38 = arith.constant 6.400000e+01 : f32
    %74 = vector.broadcast %cst_38 : f32 to vector<16x1xf32>
    %75 = arith.divf %73, %74 : vector<16x1xf32>
    %76 = vector.broadcast %68 : vector<16x1xf32> to vector<16x64xf32>
    %77 = arith.subf %64, %76 : vector<16x64xf32>
    %cst_39 = arith.constant 9.99999974E-6 : f32
    %78 = vector.broadcast %cst_39 : f32 to vector<16x1xf32>
    %79 = arith.addf %75, %78 : vector<16x1xf32>
    %80 = math.rsqrt %79 : vector<16x1xf32>
    %81 = vector.broadcast %80 : vector<16x1xf32> to vector<16x64xf32>
    %82 = arith.mulf %77, %81 : vector<16x64xf32>
    %83 = arith.mulf %82, %19 : vector<16x64xf32>
    %84 = arith.addf %83, %21 : vector<16x64xf32>
    %cst_40 = arith.constant dense<0.000000e+00> : vector<32x64xf32>
    %85 = tpu.matmul %10, %84, %cst_40 {dimension_numbers = #tpu.dot_dimension_numbers<[1], [0], [0], [1], [0, 0, 1, 1], [], []>} : vector<32x16xf32>, vector<16x64xf32>, vector<32x64xf32> -> vector<32x64xf32>
    %86 = arith.addf %85, %14 : vector<32x64xf32>
    %cst_41 = arith.constant 5.000000e-01 : f32
    %87 = vector.broadcast %cst_41 : f32 to vector<32x64xf32>
    %88 = arith.mulf %87, %86 : vector<32x64xf32>
    %cst_42 = arith.constant 2.000000e+00 : f32
    %89 = math.sqrt %cst_42 : f32
    %90 = vector.broadcast %89 : f32 to vector<32x64xf32>
    %91 = arith.divf %86, %90 : vector<32x64xf32>
    %92 = math.erf %91 : vector<32x64xf32>
    %cst_43 = arith.constant 1.000000e+00 : f32
    %93 = vector.broadcast %cst_43 : f32 to vector<32x64xf32>
    %94 = arith.addf %93, %92 : vector<32x64xf32>
    %95 = arith.mulf %88, %94 : vector<32x64xf32>
    %cst_44 = arith.constant dense<0.000000e+00> : vector<16x64xf32>
    %96 = tpu.matmul %11, %95, %cst_44 {dimension_numbers = #tpu.dot_dimension_numbers<[1], [0], [0], [1], [0, 0, 1, 1], [], []>} : vector<16x32xf32>, vector<32x64xf32>, vector<16x64xf32> -> vector<16x64xf32>
    %97 = arith.addf %61, %96 : vector<16x64xf32>
    %98 = arith.addf %97, %17 : vector<16x64xf32>
    %c16_45 = arith.constant 16 : index
    %c0_46 = arith.constant 0 : index
    %99 = vector.load %arg12[%c16_45, %c0_46] : memref<32x64xf32, #tpu.memory_space<vmem>>, vector<16x64xf32>
    tpu.vector_store %arg12[%c16_45, %c0_46], %98 {strides = array<i32>} : memref<32x64xf32, #tpu.memory_space<vmem>>, vector<16x64xf32>,
    %c0_47 = arith.constant 0 : index
    %c0_48 = arith.constant 0 : index
    %100 = vector.load %arg12[%c0_47, %c0_48] : memref<32x64xf32, #tpu.memory_space<vmem>>, vector<32x64xf32>
    %cst_49 = arith.constant dense<0.000000e+00> : vector<32xf32>
    %101 = vector.multi_reduction <add>, %100, %cst_49 [1] : vector<32x64xf32> to vector<32xf32>
    %102 = vector.shape_cast %101 : vector<32xf32> to vector<32x1xf32>
    %cst_50 = arith.constant 6.400000e+01 : f32
    %103 = vector.broadcast %cst_50 : f32 to vector<32x1xf32>
    %104 = arith.divf %102, %103 : vector<32x1xf32>
    %105 = vector.broadcast %104 : vector<32x1xf32> to vector<32x64xf32>
    %106 = arith.subf %100, %105 : vector<32x64xf32>
    %107 = arith.mulf %106, %106 : vector<32x64xf32>
    %cst_51 = arith.constant dense<0.000000e+00> : vector<32xf32>
    %108 = vector.multi_reduction <add>, %107, %cst_51 [1] : vector<32x64xf32> to vector<32xf32>
    %109 = vector.shape_cast %108 : vector<32xf32> to vector<32x1xf32>
    %cst_52 = arith.constant 6.400000e+01 : f32
    %110 = vector.broadcast %cst_52 : f32 to vector<32x1xf32>
    %111 = arith.divf %109, %110 : vector<32x1xf32>
    %112 = vector.broadcast %104 : vector<32x1xf32> to vector<32x64xf32>
    %113 = arith.subf %100, %112 : vector<32x64xf32>
    %cst_53 = arith.constant 9.99999974E-6 : f32
    %114 = vector.broadcast %cst_53 : f32 to vector<32x1xf32>
    %115 = arith.addf %111, %114 : vector<32x1xf32>
    %116 = math.rsqrt %115 : vector<32x1xf32>
    %117 = vector.broadcast %116 : vector<32x1xf32> to vector<32x64xf32>
    %118 = arith.mulf %113, %117 : vector<32x64xf32>
    %119 = vector.shape_cast %5 : vector<64xf32> to vector<1x64xf32>
    %120 = vector.broadcast %119 : vector<1x64xf32> to vector<32x64xf32>
    %121 = arith.mulf %118, %120 : vector<32x64xf32>
    %122 = vector.shape_cast %7 : vector<64xf32> to vector<1x64xf32>
    %123 = vector.broadcast %122 : vector<1x64xf32> to vector<32x64xf32>
    %124 = arith.addf %121, %123 : vector<32x64xf32>
    %c0_54 = arith.constant 0 : index
    %c0_55 = arith.constant 0 : index
    %125 = vector.load %arg8[%c0_54, %c0_55] : memref<64x128xf32, #tpu.memory_space<vmem>>, vector<64x128xf32>
    %cst_56 = arith.constant dense<0.000000e+00> : vector<32x128xf32>
    %126 = tpu.matmul %124, %125, %cst_56 {dimension_numbers = #tpu.dot_dimension_numbers<[1], [0], [0], [1], [0, 0, 1, 1], [], []>} : vector<32x64xf32>, vector<64x128xf32>, vector<32x128xf32> -> vector<32x128xf32>
    %c0_57 = arith.constant 0 : index
    %c0_58 = arith.constant 0 : index
    %127 = vector.load %arg9[%c0_57, %c0_58] : memref<1x128xf32, #tpu.memory_space<vmem>>, vector<1x128xf32>
    %128 = vector.broadcast %127 : vector<1x128xf32> to vector<32x128xf32>
    %129 = arith.addf %126, %128 : vector<32x128xf32>
    %cst_59 = arith.constant 5.000000e-01 : f32
    %130 = vector.broadcast %cst_59 : f32 to vector<32x128xf32>
    %131 = arith.mulf %130, %129 : vector<32x128xf32>
    %cst_60 = arith.constant 2.000000e+00 : f32
    %132 = math.sqrt %cst_60 : f32
    %133 = vector.broadcast %132 : f32 to vector<32x128xf32>
    %134 = arith.divf %129, %133 : vector<32x128xf32>
    %135 = math.erf %134 : vector<32x128xf32>
    %cst_61 = arith.constant 1.000000e+00 : f32
    %136 = vector.broadcast %cst_61 : f32 to vector<32x128xf32>
    %137 = arith.addf %136, %135 : vector<32x128xf32>
    %138 = arith.mulf %131, %137 : vector<32x128xf32>
    %c0_62 = arith.constant 0 : index
    %c0_63 = arith.constant 0 : index
    %139 = vector.load %arg10[%c0_62, %c0_63] : memref<128x64xf32, #tpu.memory_space<vmem>>, vector<128x64xf32>
    %cst_64 = arith.constant dense<0.000000e+00> : vector<32x64xf32>
    %140 = tpu.matmul %138, %139, %cst_64 {dimension_numbers = #tpu.dot_dimension_numbers<[1], [0], [0], [1], [0, 0, 1, 1], [], []>} : vector<32x128xf32>, vector<128x64xf32>, vector<32x64xf32> -> vector<32x64xf32>
    %141 = vector.shape_cast %9 : vector<64xf32> to vector<1x64xf32>
    %142 = vector.broadcast %141 : vector<1x64xf32> to vector<32x64xf32>
    %143 = arith.addf %140, %142 : vector<32x64xf32>
    %144 = arith.addf %100, %143 : vector<32x64xf32>
    %c0_65 = arith.constant 0 : index
    %c0_66 = arith.constant 0 : index
    %145 = vector.load %arg11[%c0_65, %c0_66] : memref<32x64xf32, #tpu.memory_space<vmem>>, vector<32x64xf32>
    tpu.vector_store %arg11[%c0_65, %c0_66], %144 {strides = array<i32>} : memref<32x64xf32, #tpu.memory_space<vmem>>, vector<32x64xf32>,
    return
  }
  func.func @transform_0(%arg0: i32) -> (i32, i32, i32) {
    %c0_i32 = arith.constant 0 : i32
    %c0_i32_0 = arith.constant 0 : i32
    %c0_i32_1 = arith.constant 0 : i32
    return %arg0, %c0_i32, %c0_i32_0 : i32, i32, i32
  }
  func.func @transform_1(%arg0: i32) -> (i32, i32) {
    %c0_i32 = arith.constant 0 : i32
    %c0_i32_0 = arith.constant 0 : i32
    return %arg0, %c0_i32 : i32, i32
  }
  func.func @transform_2(%arg0: i32) -> (i32, i32) {
    %c0_i32 = arith.constant 0 : i32
    %c0_i32_0 = arith.constant 0 : i32
    %c0_i32_1 = arith.constant 0 : i32
    return %c0_i32, %c0_i32_0 : i32, i32
  }
  func.func @transform_3(%arg0: i32) -> (i32, i32) {
    %c0_i32 = arith.constant 0 : i32
    %c0_i32_0 = arith.constant 0 : i32
    %c0_i32_1 = arith.constant 0 : i32
    return %c0_i32, %c0_i32_0 : i32, i32
  }
  func.func @transform_4(%arg0: i32) -> (i32, i32) {
    %c0_i32 = arith.constant 0 : i32
    %c0_i32_0 = arith.constant 0 : i32
    %c0_i32_1 = arith.constant 0 : i32
    return %c0_i32, %c0_i32_0 : i32, i32
  }
  func.func @transform_5(%arg0: i32) -> (i32, i32) {
    %c0_i32 = arith.constant 0 : i32
    %c0_i32_0 = arith.constant 0 : i32
    %c0_i32_1 = arith.constant 0 : i32
    return %c0_i32, %c0_i32_0 : i32, i32
  }
  func.func @transform_6(%arg0: i32) -> (i32, i32) {
    %c0_i32 = arith.constant 0 : i32
    %c0_i32_0 = arith.constant 0 : i32
    %c0_i32_1 = arith.constant 0 : i32
    return %c0_i32, %c0_i32_0 : i32, i32
  }
  func.func @transform_7(%arg0: i32) -> (i32, i32) {
    %c0_i32 = arith.constant 0 : i32
    %c0_i32_0 = arith.constant 0 : i32
    %c0_i32_1 = arith.constant 0 : i32
    return %c0_i32, %c0_i32_0 : i32, i32
  }
  func.func @transform_8(%arg0: i32) -> (i32, i32) {
    %c0_i32 = arith.constant 0 : i32
    %c0_i32_0 = arith.constant 0 : i32
    %c0_i32_1 = arith.constant 0 : i32
    return %c0_i32, %c0_i32_0 : i32, i32
  }
  func.func @transform_9(%arg0: i32) -> (i32, i32) {
    %c0_i32 = arith.constant 0 : i32
    %c0_i32_0 = arith.constant 0 : i32
    %c0_i32_1 = arith.constant 0 : i32
    return %c0_i32, %c0_i32_0 : i32, i32
  }
  func.func @transform_10(%arg0: i32) -> (i32, i32) {
    %c0_i32 = arith.constant 0 : i32
    %c0_i32_0 = arith.constant 0 : i32
    return %arg0, %c0_i32 : i32, i32
  }
}

</mosaic_0001>

<llo_original>
// kernel: mixer_block.1
$region0: #{mixer_block.1}
  #allocation0 [shape = 'u32[]', space=smem, size = 0x4, offset = 0x4, fixed_abs, tag = 'smem constant byte address 0x4 - core index']
  #allocation1 [shape = 'u32[144,128]{1,0:T(1,128)}', space=vmem, size = 0x12000, scoped, tag = 'internal scratch']
  #allocation2 [shape = 'f32[32,64]{1,0:T(8,128)}', space=vmem, size = 0x4000, scoped, tag = 'scratch operand']
  %s0 = inlined_call_operand.vmem [shape: f32[4,16,16], index: 0, kind: input, shape index: {}]
  %s1 = inlined_call_operand.vmem [shape: f32[64,64], index: 1, kind: input, shape index: {}]
  %s2 = inlined_call_operand.vmem [shape: f32[5,64], index: 2, kind: input, shape index: {}]
  %s3 = inlined_call_operand.vmem [shape: f32[32,16], index: 3, kind: input, shape index: {}]
  %s4 = inlined_call_operand.vmem [shape: f32[32,1], index: 4, kind: input, shape index: {}]
  %s5 = inlined_call_operand.vmem [shape: f32[16,32], index: 5, kind: input, shape index: {}]
  %s6 = inlined_call_operand.vmem [shape: f32[16,1], index: 6, kind: input, shape index: {}]
  %s7 = inlined_call_operand.vmem [shape: f32[64,128], index: 7, kind: input, shape index: {}]
  %s8 = inlined_call_operand.vmem [shape: f32[1,128], index: 8, kind: input, shape index: {}]
  %s9 = inlined_call_operand.vmem [shape: f32[128,64], index: 9, kind: input, shape index: {}]
  %s10 = inlined_call_operand.hbm [shape: f32[64,64], index: 10, kind: output, shape index: {}]
  %s11 = sld [smem:[#allocation0]]
  $region73: #{mixer_block.1} parent=0
    _
  %s13 = ssub.s32 1, %s11
  %s14 = scalar_select 0, %s13, %s11
  $region1: #{mixer_block.1} parent=0
    #allocation3 [shape = 'u8[32768]{0}', space=vmem, size = 0x8000, scoped, tag = 'output window, operand 0']
    #allocation4 [shape = 's32[2]{0}', space=sflag, size = 0x8, scoped, tag = 'scoped memory for mixer_block.1']
    %15 = vsyncpa [#allocation4], 0
    %s16 = scalar_lea.sflag [#allocation4], 1
    %17 = vsyncpa %s16, 0
    loop: start=0, step=1, limit=4
    $region2: #{mixer_block.1} parent=1 // loop_pre_header
      _
    $region3: #{mixer_block.1} parent=1 // loop_header
      %s19 = sphi 0, %s23
      %p20 = scmp.ge.s32.totalorder %s19, 4
      %s29 = sphi 0, %s31
      %s32 = sphi 0, %s29
      %s33 = sphi 0, %s32
      %s49 = sphi 0, %s33
      %s55 = sphi 0, %s57
      %s58 = sphi 0, %s55
      %s59 = sphi 0, %s58
      %s75 = sphi 0, %s59
      %s79 = sphi 0, %s79
      %s81 = sphi 0, %s79
      %s82 = sphi 0, %s81
      %s96 = sphi 0, %s82
      %s100 = sphi 0, %s100
      %s102 = sphi 0, %s100
      %s103 = sphi 0, %s102
      %s117 = sphi 0, %s103
      %s121 = sphi 0, %s121
      %s123 = sphi 0, %s121
      %s124 = sphi 0, %s123
      %s138 = sphi 0, %s124
      %s142 = sphi 0, %s142
      %s144 = sphi 0, %s142
      %s145 = sphi 0, %s144
      %s159 = sphi 0, %s145
      %s163 = sphi 0, %s163
      %s165 = sphi 0, %s163
      %s166 = sphi 0, %s165
      %s180 = sphi 0, %s166
      %s184 = sphi 0, %s184
      %s186 = sphi 0, %s184
      %s187 = sphi 0, %s186
      %s201 = sphi 0, %s187
      %s205 = sphi 0, %s205
      %s207 = sphi 0, %s205
      %s208 = sphi 0, %s207
      %s222 = sphi 0, %s208
      %s226 = sphi 0, %s226
      %s228 = sphi 0, %s226
      %s229 = sphi 0, %s228
      %s243 = sphi 0, %s229
      %s249 = sphi 0, %s251
      %s252 = sphi 0, %s249
      %s253 = sphi 0, %s252
      %s269 = sphi 0, %s253
    $region4: #{mixer_block.1} parent=1 // loop_header_branch
      %22 = sbr.rel (%p20) target = $region8
    $region5: #{mixer_block.1} parent=1 // loop_body
      %s24 = ssub.s32 %s19, 1
      %s25 = ssub.s32 %s19, 2
      %s26 = sadd.s32 %s19, 1
      %s27 = ssub.s32 %s19, %s26
      %p28 = scmp.eq.s32.totalorder %s27, 0
      %s30 = sadd.s32 %s29, 1
      %s31 = scalar_select %p28, %s29, %s30
      %p34 = pneg %p28
      %p35 = scmp.eq.s32.totalorder %s19, 1
      %p36 = por %p34, %p35
      %p37 = scmp.ne.s32.totalorder %s29, %s32
      %p38 = scmp.eq.s32.totalorder %s19, 0
      %p39 = por %p37, %p38
      %p40 = scmp.ne.s32.totalorder %s29, %s32
      %p41 = scmp.eq.s32.totalorder %s24, 1
      %p42 = por %p40, %p41
      %p43 = scmp.ne.s32.totalorder %s32, %s33
      %p44 = scmp.eq.s32.totalorder %s24, 0
      %p45 = por %p43, %p44
      %p46 = scmp.ne.s32.totalorder %s32, %s33
      %p47 = scmp.eq.s32.totalorder %s25, 1
      %p48 = por %p46, %p47
      %p50 = scmp.ne.s32.totalorder %s33, %s49
      %p51 = scmp.eq.s32.totalorder %s25, 0
      %p52 = por %p50, %p51
      %s53 = ssub.s32 %s19, %s26
      %p54 = scmp.eq.s32.totalorder %s53, 0
      %s56 = sadd.s32 %s55, 1
      %s57 = scalar_select %p54, %s55, %s56
      %p60 = pneg %p54
      %p61 = scmp.eq.s32.totalorder %s19, 1
      %p62 = por %p60, %p61
      %p63 = scmp.ne.s32.totalorder %s55, %s58
      %p64 = scmp.eq.s32.totalorder %s19, 0
      %p65 = por %p63, %p64
      %p66 = scmp.ne.s32.totalorder %s55, %s58
      %p67 = scmp.eq.s32.totalorder %s24, 1
      %p68 = por %p66, %p67
      %p69 = scmp.ne.s32.totalorder %s58, %s59
      %p70 = scmp.eq.s32.totalorder %s24, 0
      %p71 = por %p69, %p70
      %p72 = scmp.ne.s32.totalorder %s58, %s59
      %p73 = scmp.eq.s32.totalorder %s25, 1
      %p74 = por %p72, %p73
      %p76 = scmp.ne.s32.totalorder %s59, %s75
      %p77 = scmp.eq.s32.totalorder %s25, 0
      %p78 = por %p76, %p77
      %s80 = sadd.s32 %s79, 1
      %p83 = scmp.eq.s32.totalorder %s19, 1
      %p84 = scmp.ne.s32.totalorder %s79, %s81
      %p85 = scmp.eq.s32.totalorder %s19, 0
      %p86 = por %p84, %p85
      %p87 = scmp.ne.s32.totalorder %s79, %s81
      %p88 = scmp.eq.s32.totalorder %s24, 1
      %p89 = por %p87, %p88
      %p90 = scmp.ne.s32.totalorder %s81, %s82
      %p91 = scmp.eq.s32.totalorder %s24, 0
      %p92 = por %p90, %p91
      %p93 = scmp.ne.s32.totalorder %s81, %s82
      %p94 = scmp.eq.s32.totalorder %s25, 1
      %p95 = por %p93, %p94
      %p97 = scmp.ne.s32.totalorder %s82, %s96
      %p98 = scmp.eq.s32.totalorder %s25, 0
      %p99 = por %p97, %p98
      %s101 = sadd.s32 %s100, 1
      %p104 = scmp.eq.s32.totalorder %s19, 1
      %p105 = scmp.ne.s32.totalorder %s100, %s102
      %p106 = scmp.eq.s32.totalorder %s19, 0
      %p107 = por %p105, %p106
      %p108 = scmp.ne.s32.totalorder %s100, %s102
      %p109 = scmp.eq.s32.totalorder %s24, 1
      %p110 = por %p108, %p109
      %p111 = scmp.ne.s32.totalorder %s102, %s103
      %p112 = scmp.eq.s32.totalorder %s24, 0
      %p113 = por %p111, %p112
      %p114 = scmp.ne.s32.totalorder %s102, %s103
      %p115 = scmp.eq.s32.totalorder %s25, 1
      %p116 = por %p114, %p115
      %p118 = scmp.ne.s32.totalorder %s103, %s117
      %p119 = scmp.eq.s32.totalorder %s25, 0
      %p120 = por %p118, %p119
      %s122 = sadd.s32 %s121, 1
      %p125 = scmp.eq.s32.totalorder %s19, 1
      %p126 = scmp.ne.s32.totalorder %s121, %s123
      %p127 = scmp.eq.s32.totalorder %s19, 0
      %p128 = por %p126, %p127
      %p129 = scmp.ne.s32.totalorder %s121, %s123
      %p130 = scmp.eq.s32.totalorder %s24, 1
      %p131 = por %p129, %p130
      %p132 = scmp.ne.s32.totalorder %s123, %s124
      %p133 = scmp.eq.s32.totalorder %s24, 0
      %p134 = por %p132, %p133
      %p135 = scmp.ne.s32.totalorder %s123, %s124
      %p136 = scmp.eq.s32.totalorder %s25, 1
      %p137 = por %p135, %p136
      %p139 = scmp.ne.s32.totalorder %s124, %s138
      %p140 = scmp.eq.s32.totalorder %s25, 0
      %p141 = por %p139, %p140
      %s143 = sadd.s32 %s142, 1
      %p146 = scmp.eq.s32.totalorder %s19, 1
      %p147 = scmp.ne.s32.totalorder %s142, %s144
      %p148 = scmp.eq.s32.totalorder %s19, 0
      %p149 = por %p147, %p148
      %p150 = scmp.ne.s32.totalorder %s142, %s144
      %p151 = scmp.eq.s32.totalorder %s24, 1
      %p152 = por %p150, %p151
      %p153 = scmp.ne.s32.totalorder %s144, %s145
      %p154 = scmp.eq.s32.totalorder %s24, 0
      %p155 = por %p153, %p154
      %p156 = scmp.ne.s32.totalorder %s144, %s145
      %p157 = scmp.eq.s32.totalorder %s25, 1
      %p158 = por %p156, %p157
      %p160 = scmp.ne.s32.totalorder %s145, %s159
      %p161 = scmp.eq.s32.totalorder %s25, 0
      %p162 = por %p160, %p161
      %s164 = sadd.s32 %s163, 1
      %p167 = scmp.eq.s32.totalorder %s19, 1
      %p168 = scmp.ne.s32.totalorder %s163, %s165
      %p169 = scmp.eq.s32.totalorder %s19, 0
      %p170 = por %p168, %p169
      %p171 = scmp.ne.s32.totalorder %s163, %s165
      %p172 = scmp.eq.s32.totalorder %s24, 1
      %p173 = por %p171, %p172
      %p174 = scmp.ne.s32.totalorder %s165, %s166
      %p175 = scmp.eq.s32.totalorder %s24, 0
      %p176 = por %p174, %p175
      %p177 = scmp.ne.s32.totalorder %s165, %s166
      %p178 = scmp.eq.s32.totalorder %s25, 1
      %p179 = por %p177, %p178
      %p181 = scmp.ne.s32.totalorder %s166, %s180
      %p182 = scmp.eq.s32.totalorder %s25, 0
      %p183 = por %p181, %p182
      %s185 = sadd.s32 %s184, 1
      %p188 = scmp.eq.s32.totalorder %s19, 1
      %p189 = scmp.ne.s32.totalorder %s184, %s186
      %p190 = scmp.eq.s32.totalorder %s19, 0
      %p191 = por %p189, %p190
      %p192 = scmp.ne.s32.totalorder %s184, %s186
      %p193 = scmp.eq.s32.totalorder %s24, 1
      %p194 = por %p192, %p193
      %p195 = scmp.ne.s32.totalorder %s186, %s187
      %p196 = scmp.eq.s32.totalorder %s24, 0
      %p197 = por %p195, %p196
      %p198 = scmp.ne.s32.totalorder %s186, %s187
      %p199 = scmp.eq.s32.totalorder %s25, 1
      %p200 = por %p198, %p199
      %p202 = scmp.ne.s32.totalorder %s187, %s201
      %p203 = scmp.eq.s32.totalorder %s25, 0
      %p204 = por %p202, %p203
      %s206 = sadd.s32 %s205, 1
      %p209 = scmp.eq.s32.totalorder %s19, 1
      %p210 = scmp.ne.s32.totalorder %s205, %s207
      %p211 = scmp.eq.s32.totalorder %s19, 0
      %p212 = por %p210, %p211
      %p213 = scmp.ne.s32.totalorder %s205, %s207
      %p214 = scmp.eq.s32.totalorder %s24, 1
      %p215 = por %p213, %p214
      %p216 = scmp.ne.s32.totalorder %s207, %s208
      %p217 = scmp.eq.s32.totalorder %s24, 0
      %p218 = por %p216, %p217
      %p219 = scmp.ne.s32.totalorder %s207, %s208
      %p220 = scmp.eq.s32.totalorder %s25, 1
      %p221 = por %p219, %p220
      %p223 = scmp.ne.s32.totalorder %s208, %s222
      %p224 = scmp.eq.s32.totalorder %s25, 0
      %p225 = por %p223, %p224
      %s227 = sadd.s32 %s226, 1
      %p230 = scmp.eq.s32.totalorder %s19, 1
      %p231 = scmp.ne.s32.totalorder %s226, %s228
      %p232 = scmp.eq.s32.totalorder %s19, 0
      %p233 = por %p231, %p232
      %p234 = scmp.ne.s32.totalorder %s226, %s228
      %p235 = scmp.eq.s32.totalorder %s24, 1
      %p236 = por %p234, %p235
      %p237 = scmp.ne.s32.totalorder %s228, %s229
      %p238 = scmp.eq.s32.totalorder %s24, 0
      %p239 = por %p237, %p238
      %p240 = scmp.ne.s32.totalorder %s228, %s229
      %p241 = scmp.eq.s32.totalorder %s25, 1
      %p242 = por %p240, %p241
      %p244 = scmp.ne.s32.totalorder %s229, %s243
      %p245 = scmp.eq.s32.totalorder %s25, 0
      %p246 = por %p244, %p245
      %s247 = ssub.s32 %s19, %s26
      %p248 = scmp.eq.s32.totalorder %s247, 0
      %s250 = sadd.s32 %s249, 1
      %s251 = scalar_select %p248, %s249, %s250
      %p254 = pneg %p248
      %p255 = scmp.eq.s32.totalorder %s19, 1
      %p256 = por %p254, %p255
      %p257 = scmp.ne.s32.totalorder %s249, %s252
      %p258 = scmp.eq.s32.totalorder %s19, 0
      %p259 = por %p257, %p258
      %p260 = scmp.ne.s32.totalorder %s249, %s252
      %p261 = scmp.eq.s32.totalorder %s24, 1
      %p262 = por %p260, %p261
      %p263 = scmp.ne.s32.totalorder %s252, %s253
      %p264 = scmp.eq.s32.totalorder %s24, 0
      %p265 = por %p263, %p264
      %p266 = scmp.ne.s32.totalorder %s252, %s253
      %p267 = scmp.eq.s32.totalorder %s25, 1
      %p268 = por %p266, %p267
      %p270 = scmp.ne.s32.totalorder %s253, %s269
      %p271 = scmp.eq.s32.totalorder %s25, 0
      %p272 = por %p270, %p271
      %p273 = scmp.le.s32.totalorder 1, %s19
      %p274 = scmp.lt.s32.totalorder %s19, 3
      %p275 = pnand %p273, %p274
      %p276 = pneg %p275
      // Predicated region
      $region9: #{mixer_block.1} parent=5 // pred_check
        _
      $region10: #{mixer_block.1} parent=5 // pred_check_branch
        %278 = sbr.rel (%p275) target = $region12
      $region11: #{mixer_block.1} parent=5 // pred_region
        %s279 = ssub.s32 %s19, 1
        // Predicated region
        $region13: #{mixer_block.1} parent=11 // pred_check
          %p280 = pneg %p92
        $region14: #{mixer_block.1} parent=11 // pred_check_branch
          %282 = sbr.rel (%p280) target = $region16
        $region15: #{mixer_block.1} parent=11 // pred_region
          _
        $region16: #{mixer_block.1} parent=11 // pred_fallthru
          _
        // Predicated region
        $region17: #{mixer_block.1} parent=11 // pred_check
          %p283 = pneg %p113
        $region18: #{mixer_block.1} parent=11 // pred_check_branch
          %285 = sbr.rel (%p283) target = $region20
        $region19: #{mixer_block.1} parent=11 // pred_region
          _
        $region20: #{mixer_block.1} parent=11 // pred_fallthru
          _
        // Predicated region
        $region21: #{mixer_block.1} parent=11 // pred_check
          %p286 = pneg %p134
        $region22: #{mixer_block.1} parent=11 // pred_check_branch
          %288 = sbr.rel (%p286) target = $region24
        $region23: #{mixer_block.1} parent=11 // pred_region
          _
        $region24: #{mixer_block.1} parent=11 // pred_fallthru
          _
        // Predicated region
        $region25: #{mixer_block.1} parent=11 // pred_check
          %p289 = pneg %p155
        $region26: #{mixer_block.1} parent=11 // pred_check_branch
          %291 = sbr.rel (%p289) target = $region28
        $region27: #{mixer_block.1} parent=11 // pred_region
          _
        $region28: #{mixer_block.1} parent=11 // pred_fallthru
          _
        // Predicated region
        $region29: #{mixer_block.1} parent=11 // pred_check
          %p292 = pneg %p176
        $region30: #{mixer_block.1} parent=11 // pred_check_branch
          %294 = sbr.rel (%p292) target = $region32
        $region31: #{mixer_block.1} parent=11 // pred_region
          _
        $region32: #{mixer_block.1} parent=11 // pred_fallthru
          _
        // Predicated region
        $region33: #{mixer_block.1} parent=11 // pred_check
          %p295 = pneg %p197
        $region34: #{mixer_block.1} parent=11 // pred_check_branch
          %297 = sbr.rel (%p295) target = $region36
        $region35: #{mixer_block.1} parent=11 // pred_region
          _
        $region36: #{mixer_block.1} parent=11 // pred_fallthru
          _
        // Predicated region
        $region37: #{mixer_block.1} parent=11 // pred_check
          %p298 = pneg %p218
        $region38: #{mixer_block.1} parent=11 // pred_check_branch
          %300 = sbr.rel (%p298) target = $region40
        $region39: #{mixer_block.1} parent=11 // pred_region
          _
        $region40: #{mixer_block.1} parent=11 // pred_fallthru
          _
        // Predicated region
        $region41: #{mixer_block.1} parent=11 // pred_check
          %p301 = pneg %p239
        $region42: #{mixer_block.1} parent=11 // pred_check_branch
          %303 = sbr.rel (%p301) target = $region44
        $region43: #{mixer_block.1} parent=11 // pred_region
          _
        $region44: #{mixer_block.1} parent=11 // pred_fallthru
          _
      $region12: #{mixer_block.1} parent=5 // pred_fallthru
        _
      %p304 = scmp.lt.s32.totalorder %s19, 2
      // Predicated region
      $region45: #{mixer_block.1} parent=5 // pred_check
        %p305 = pneg %p304
      $region46: #{mixer_block.1} parent=5 // pred_check_branch
        %307 = sbr.rel (%p305) target = $region48
      $region47: #{mixer_block.1} parent=5 // pred_region
        // Predicated region
        $region49: #{mixer_block.1} parent=47 // pred_check
          %p308 = pneg %p39
        $region50: #{mixer_block.1} parent=47 // pred_check_branch
          %310 = sbr.rel (%p308) target = $region52
        $region51: #{mixer_block.1} parent=47 // pred_region
          %s311 = smul.u32 2, %s19
          %p312 = scmp.lt.s32.totalorder %s311, 3
          %s313 = scalar_select %p312, %s311, 3
          %s314 = smul.addr %s313, 2
          %s315 = smul.addr %s314, 8
          %s316 = scalar_lea.vmem %s0, %s315
          %s317 = smul.u32 2, %s19
        $region52: #{mixer_block.1} parent=47 // pred_fallthru
          _
        // Predicated region
        $region53: #{mixer_block.1} parent=47 // pred_check
          %p318 = pneg %p65
        $region54: #{mixer_block.1} parent=47 // pred_check_branch
          %320 = sbr.rel (%p318) target = $region56
        $region55: #{mixer_block.1} parent=47 // pred_region
          %s321 = smul.u32 4, %s19
          %p322 = scmp.lt.s32.totalorder %s321, 7
          %s323 = scalar_select %p322, %s321, 7
          %s324 = smul.addr %s323, 8
          %s325 = scalar_lea.vmem %s1, %s324
          %s326 = smul.u32 4, %s19
        $region56: #{mixer_block.1} parent=47 // pred_fallthru
          _
      $region48: #{mixer_block.1} parent=5 // pred_fallthru
        _
      %p327 = scmp.le.s32.totalorder 1, %s19
      %p328 = scmp.lt.s32.totalorder %s19, 3
      %p329 = pnand %p327, %p328
      %p330 = pneg %p329
      // Predicated region
      $region57: #{mixer_block.1} parent=5 // pred_check
        _
      $region58: #{mixer_block.1} parent=5 // pred_check_branch
        %332 = sbr.rel (%p329) target = $region60
      $region59: #{mixer_block.1} parent=5 // pred_region
        %s333 = ssub.s32 %s19, 1
        %s334 = smul.u32 2, %s24
        %p335 = scmp.lt.s32.totalorder %s334, 3
        %s336 = scalar_select %p335, %s334, 3
        %s337 = smul.addr %s336, 2
        %s338 = smul.addr %s337, 8
        %s339 = scalar_lea.vmem %s0, %s338
        %p340 = pneg %p45
        %p341 = pneg %p42
        %s342 = smul.u32 4, %s24
        %p343 = scmp.lt.s32.totalorder %s342, 7
        %s344 = scalar_select %p343, %s342, 7
        %s345 = smul.addr %s344, 8
        %s346 = scalar_lea.vmem %s1, %s345
        %p347 = pneg %p71
        %p348 = pneg %p68
        %p349 = pneg %p92
        %p350 = pneg %p89
        %p351 = pneg %p113
        %p352 = pneg %p110
        %p353 = pneg %p134
        %p354 = pneg %p131
        %p355 = pneg %p155
        %p356 = pneg %p152
        %p357 = pneg %p176
        %p358 = pneg %p173
        %p359 = pneg %p197
        %p360 = pneg %p194
        %p361 = pneg %p218
        %p362 = pneg %p215
        %p363 = pneg %p239
        %p364 = pneg %p236
        %p365 = pneg %p265
        %p366 = pneg %p262
        %s367 = sand.u32 %s252, 1
        %s368 = scalar_lea.sflag [#allocation4], %s367
        %s369 = sand.u32 %s252, 1
        %s370 = smul.addr %s369, 32
        %s371 = scalar_lea.vmem [#allocation3], %s370
        %s372 = smul.u32 2, %s24
        %p373 = scmp.lt.s32.totalorder %s372, 3
        %s374 = scalar_select %p373, %s372, 3
        %s375 = smul.addr %s374, 2
        %s376 = smul.addr %s375, 8
        %s377 = scalar_lea.vmem %s0, %s376
        %s378 = smul.u32 2, %s24
        %s379 = smul.u32 4, %s24
        %p380 = scmp.lt.s32.totalorder %s379, 7
        %s381 = scalar_select %p380, %s379, 7
        %s382 = smul.addr %s381, 8
        %s383 = scalar_lea.vmem %s1, %s382
        %s384 = smul.u32 4, %s24
        %s385 = smul.u32 4, %s24
        %v386 = vld [vmem:[%s2] sm:$0x1]
        %v387 = vld [vmem:[%s2 + $0x1] sm:$0x1]
        %v388 = vld [vmem:[%s2 + $0x2] sm:$0x1]
        %v389 = vld [vmem:[%s2 + $0x3] sm:$0x1]
        %v390 = vld [vmem:[%s2 + $0x4] sm:$0x1]
        %v391 = vld [vmem:[%s3] sm:$0xff]
        %v392 = vld [vmem:[%s3 + $0x8] sm:$0xff]
        %v393 = vld [vmem:[%s3 + $0x10] sm:$0xff]
        %v394 = vld [vmem:[%s3 + $0x18] sm:$0xff]
        %v395 = vld [vmem:[%s5] sm:$0xff]
        %v396 = vld [vmem:[%s5 + $0x8] sm:$0xff]
        %v397 = vld [vmem:[%s4] sm:$0xff]
        %v398 = vld [vmem:[%s4 + $0x8] sm:$0xff]
        %v399 = vld [vmem:[%s4 + $0x10] sm:$0xff]
        %v400 = vld [vmem:[%s4 + $0x18] sm:$0xff]
        %402 = vset.pattern.permute.xlu0 0
        %403 = vperm.xlu0 %402, %v397
        %v404 = vpop.permute.xlu0 %403
        %407 = vset.pattern.permute.xlu0 0
        %408 = vperm.xlu0 %407, %v398
        %v409 = vpop.permute.xlu0 %408
        %412 = vset.pattern.permute.xlu0 0
        %413 = vperm.xlu0 %412, %v399
        %v414 = vpop.permute.xlu0 %413
        %417 = vset.pattern.permute.xlu0 0
        %418 = vperm.xlu0 %417, %v400
        %v419 = vpop.permute.xlu0 %418
        %v421 = vld [vmem:[%s6] sm:$0xff]
        %v422 = vld [vmem:[%s6 + $0x8] sm:$0xff]
        %424 = vset.pattern.permute.xlu0 0
        %425 = vperm.xlu0 %424, %v421
        %v426 = vpop.permute.xlu0 %425
        %429 = vset.pattern.permute.xlu0 0
        %430 = vperm.xlu0 %429, %v422
        %v431 = vpop.permute.xlu0 %430
        %v433 = vlaneseq
        %v434 = vshrl.u32 %v433, 7
        %v435 = vsub.s32 0, %v434
        %v436 = vrot.slane %v386, %v435
        %v437 = vlaneseq
        %v438 = vshrl.u32 %v437, 7
        %v439 = vsub.s32 0, %v438
        %v440 = vrot.slane %v387, %v439
        %v441 = vld [vmem:[%s383] sm:$0xff]
        %v442 = vld [vmem:[%s383 + $0x8] sm:$0xff]
        %v443 = vld [vmem:[%s377] sm:$0xff]
        %v444 = vld [vmem:[%s377 + $0x8] sm:$0xff]
        %vm445 = vcmask 130048
        %v447 = vsel %vm445, %v443, 0
        %v450 = vsel %vm445, %v444, 0
        %452 = vmatprep.subr.mxu0 0.0
        %453 = vmatpush1.msra.mxu0 %v441
        %454 = vmatprep.subr.mxu0 0.0
        %455 = vmatpush1.msra.mxu0 %v442
        %456 = vmatprep.subr.mxu0 0.0
        %457 = vmatpush1.msra.mxu0 0.0
        %458 = vmatprep.subr.mxu0 0.0
        %459 = vmatpush1.msra.mxu0 0.0
        %460 = vmatprep.subr.mxu0 0.0
        %461 = vmatpush1.msra.mxu0 0.0
        %462 = vmatprep.subr.mxu0 0.0
        %463 = vmatpush1.msra.mxu0 0.0
        %464 = vmatprep.subr.mxu0 0.0
        %465 = vmatpush1.msra.mxu0 0.0
        %466 = vmatprep.subr.mxu0 0.0
        %467 = vmatpush1.msra.mxu0 0.0
        %468 = vmatprep.subr.mxu0 0.0
        %469 = vmatpush1.msra.mxu0 0.0
        %470 = vmatprep.subr.mxu0 0.0
        %471 = vmatpush1.msra.mxu0 0.0
        %472 = vmatprep.subr.mxu0 0.0
        %473 = vmatpush1.msra.mxu0 0.0
        %474 = vmatprep.subr.mxu0 0.0
        %475 = vmatpush1.msra.mxu0 0.0
        %476 = vmatprep.subr.mxu0 0.0
        %477 = vmatpush1.msra.mxu0 0.0
        %478 = vmatprep.subr.mxu0 0.0
        %479 = vmatpush1.msra.mxu0 0.0
        %480 = vmatprep.subr.mxu0 0.0
        %481 = vmatpush1.msra.mxu0 0.0
        %482 = vmatprep.subr.mxu0 0.0
        %483 = vmatpush1.msra.mxu0 0.0
        %484 = vmatprep.subr.mxu0 0.0
        %485 = vmatpush1.msra.mxu0 0.0
        %486 = vmatprep.subr.mxu0 0.0
        %487 = vmatpush1.msra.mxu0 0.0
        %488 = vmatprep.subr.mxu0 0.0
        %489 = vmatpush1.msra.mxu0 0.0
        %490 = vmatprep.subr.mxu0 0.0
        %491 = vmatpush1.msra.mxu0 0.0
        %492 = vmatprep.subr.mxu0 0.0
        %493 = vmatpush1.msra.mxu0 0.0
        %494 = vmatprep.subr.mxu0 0.0
        %495 = vmatpush1.msra.mxu0 0.0
        %496 = vmatprep.subr.mxu0 0.0
        %497 = vmatpush1.msra.mxu0 0.0
        %498 = vmatprep.subr.mxu0 0.0
        %499 = vmatpush1.msra.mxu0 0.0
        %500 = vmatprep.subr.mxu0 0.0
        %501 = vmatpush1.msra.mxu0 0.0
        %502 = vmatprep.subr.mxu0 0.0
        %503 = vmatpush1.msra.mxu0 0.0
        %504 = vmatprep.subr.mxu0 0.0
        %505 = vmatpush1.msra.mxu0 0.0
        %506 = vmatprep.subr.mxu0 0.0
        %507 = vmatpush1.msra.mxu0 0.0
        %508 = vmatprep.subr.mxu0 0.0
        %509 = vmatpush1.msra.mxu0 0.0
        %510 = vmatprep.subr.mxu0 0.0
        %511 = vmatpush1.msra.mxu0 0.0
        %512 = vmatprep.subr.mxu0 0.0
        %513 = vmatpush1.msra.mxu0 0.0
        %514 = vmatprep.subr.mxu0 0.0
        %515 = vmatpush1.msra.mxu0 0.0
        %516 = vmatprep.mubr.f32.mxu0 0.0
        %517 = vmatmul.mubr.f32.gmra.mrb[0].mxu0 %v447
        %v518 = vpop.f32.mrb[0].mxu0
        %v519 = vadd.f32 0.0, %v518
        %v520 = vpop.f32.mrb[0].mxu0
        %521 = vmatprep.mubr.f32.mxu0 0.0
        %522 = vmatmul.mubr.f32.gmra.mrb[0].mxu0 %v450
        %v523 = vpop.f32.mrb[0].mxu0
        %v524 = vadd.f32 0.0, %v523
        %v525 = vpop.f32.mrb[0].mxu0
        %526 = vdwg.mxu0
        %vm527 = vcmask 523264
        %v528 = vsel %vm527, %v519, 0.0
        %529 = vadd.xlane.f32.xlu0 %v528
        %v530 = vpop.xlane.xlu0 %529
        %v531 = vsel %vm527, %v524, 0.0
        %532 = vadd.xlane.f32.xlu0 %v531
        %v533 = vpop.xlane.xlu0 %532
        %v534 = vrcp.pop 64.0
        %v535 = vmul.f32 %v530, %v534
        %v536 = vmul.f32 %v533, %v534
        %v537 = vsub.f32 %v519, %v535
        %v538 = vsub.f32 %v524, %v536
        %v539 = vmul.f32 %v537, %v537
        %v540 = vmul.f32 %v538, %v538
        %v541 = vsel %vm527, %v539, 0.0
        %542 = vadd.xlane.f32.xlu0 %v541
        %v543 = vpop.xlane.xlu0 %542
        %v544 = vsel %vm527, %v540, 0.0
        %545 = vadd.xlane.f32.xlu0 %v544
        %v546 = vpop.xlane.xlu0 %545
        %v547 = vmul.f32 %v543, %v534
        %v548 = vmul.f32 %v546, %v534
        %v549 = vadd.f32 %v547, 1e-05
        %v550 = vadd.f32 %v548, 1e-05
        %v551 = vrsqrt.pop %v549
        %v552 = vrsqrt.pop %v550
        %v553 = vmul.f32 %v537, %v551
        %v554 = vmul.f32 %v538, %v552
        %v555 = vmul.f32 %v553, %v436
        %v556 = vmul.f32 %v554, %v436
        %v557 = vadd.f32 %v555, %v440
        %v558 = vadd.f32 %v556, %v440
        %v560 = vsel %vm445, %v391, 0
        %v563 = vsel %vm445, %v392, 0
        %v566 = vsel %vm445, %v393, 0
        %v569 = vsel %vm445, %v394, 0
        %571 = vmatprep.subr.mxu0 0.0
        %572 = vmatpush1.msra.mxu0 %v557
        %573 = vmatprep.subr.mxu0 0.0
        %574 = vmatpush1.msra.mxu0 %v558
        %575 = vmatprep.subr.mxu0 0.0
        %576 = vmatpush1.msra.mxu0 0.0
        %577 = vmatprep.subr.mxu0 0.0
        %578 = vmatpush1.msra.mxu0 0.0
        %579 = vmatprep.subr.mxu0 0.0
        %580 = vmatpush1.msra.mxu0 0.0
        %581 = vmatprep.subr.mxu0 0.0
        %582 = vmatpush1.msra.mxu0 0.0
        %583 = vmatprep.subr.mxu0 0.0
        %584 = vmatpush1.msra.mxu0 0.0
        %585 = vmatprep.subr.mxu0 0.0
        %586 = vmatpush1.msra.mxu0 0.0
        %587 = vmatprep.subr.mxu0 0.0
        %588 = vmatpush1.msra.mxu0 0.0
        %589 = vmatprep.subr.mxu0 0.0
        %590 = vmatpush1.msra.mxu0 0.0
        %591 = vmatprep.subr.mxu0 0.0
        %592 = vmatpush1.msra.mxu0 0.0
        %593 = vmatprep.subr.mxu0 0.0
        %594 = vmatpush1.msra.mxu0 0.0
        %595 = vmatprep.subr.mxu0 0.0
        %596 = vmatpush1.msra.mxu0 0.0
        %597 = vmatprep.subr.mxu0 0.0
        %598 = vmatpush1.msra.mxu0 0.0
        %599 = vmatprep.subr.mxu0 0.0
        %600 = vmatpush1.msra.mxu0 0.0
        %601 = vmatprep.subr.mxu0 0.0
        %602 = vmatpush1.msra.mxu0 0.0
        %603 = vmatprep.subr.mxu0 0.0
        %604 = vmatpush1.msra.mxu0 0.0
        %605 = vmatprep.subr.mxu0 0.0
        %606 = vmatpush1.msra.mxu0 0.0
        %607 = vmatprep.subr.mxu0 0.0
        %608 = vmatpush1.msra.mxu0 0.0
        %609 = vmatprep.subr.mxu0 0.0
        %610 = vmatpush1.msra.mxu0 0.0
        %611 = vmatprep.subr.mxu0 0.0
        %612 = vmatpush1.msra.mxu0 0.0
        %613 = vmatprep.subr.mxu0 0.0
        %614 = vmatpush1.msra.mxu0 0.0
        %615 = vmatprep.subr.mxu0 0.0
        %616 = vmatpush1.msra.mxu0 0.0
        %617 = vmatprep.subr.mxu0 0.0
        %618 = vmatpush1.msra.mxu0 0.0
        %619 = vmatprep.subr.mxu0 0.0
        %620 = vmatpush1.msra.mxu0 0.0
        %621 = vmatprep.subr.mxu0 0.0
        %622 = vmatpush1.msra.mxu0 0.0
        %623 = vmatprep.subr.mxu0 0.0
        %624 = vmatpush1.msra.mxu0 0.0
        %625 = vmatprep.subr.mxu0 0.0
        %626 = vmatpush1.msra.mxu0 0.0
        %627 = vmatprep.subr.mxu0 0.0
        %628 = vmatpush1.msra.mxu0 0.0
        %629 = vmatprep.subr.mxu0 0.0
        %630 = vmatpush1.msra.mxu0 0.0
        %631 = vmatprep.subr.mxu0 0.0
        %632 = vmatpush1.msra.mxu0 0.0
        %633 = vmatprep.subr.mxu0 0.0
        %634 = vmatpush1.msra.mxu0 0.0
        %635 = vmatprep.mubr.f32.mxu0 0.0
        %636 = vmatmul.mubr.f32.gmra.mrb[0].mxu0 %v560
        %v637 = vpop.f32.mrb[0].mxu0
        %v638 = vadd.f32 %v404, %v637
        %v639 = vpop.f32.mrb[0].mxu0
        %640 = vmatprep.mubr.f32.mxu0 0.0
        %641 = vmatmul.mubr.f32.gmra.mrb[0].mxu0 %v563
        %v642 = vpop.f32.mrb[0].mxu0
        %v643 = vadd.f32 %v409, %v642
        %v644 = vpop.f32.mrb[0].mxu0
        %645 = vmatprep.mubr.f32.mxu0 0.0
        %646 = vmatmul.mubr.f32.gmra.mrb[0].mxu0 %v566
        %v647 = vpop.f32.mrb[0].mxu0
        %v648 = vadd.f32 %v414, %v647
        %v649 = vpop.f32.mrb[0].mxu0
        %650 = vmatprep.mubr.f32.mxu0 0.0
        %651 = vmatmul.mubr.f32.gmra.mrb[0].mxu0 %v569
        %v652 = vpop.f32.mrb[0].mxu0
        %v653 = vadd.f32 %v419, %v652
        %v654 = vpop.f32.mrb[0].mxu0
        %655 = vdwg.mxu0
        %v656 = vmul.f32 %v638, 0.5
        %v657 = vmul.f32 %v643, 0.5
        %v658 = vmul.f32 %v648, 0.5
        %v659 = vmul.f32 %v653, 0.5
        %v660 = vrcp.pop 1.4142135
        %v661 = vmul.f32 %v638, %v660
        %v662 = vmul.f32 %v643, %v660
        %v663 = vmul.f32 %v648, %v660
        %v664 = vmul.f32 %v653, %v660
        %v665 = verf.f32.pop %v661
        %v666 = verf.f32.pop %v662
        %v667 = verf.f32.pop %v663
        %v668 = verf.f32.pop %v664
        %v669 = vadd.f32 %v665, 1.0
        %v670 = vadd.f32 %v666, 1.0
        %v671 = vadd.f32 %v667, 1.0
        %v672 = vadd.f32 %v668, 1.0
        %v673 = vmul.f32 %v656, %v669
        %v674 = vmul.f32 %v657, %v670
        %v675 = vmul.f32 %v658, %v671
        %v676 = vmul.f32 %v659, %v672
        %vm677 = vcmask 261120
        %v679 = vsel %vm677, %v395, 0
        %v682 = vsel %vm677, %v396, 0
        %684 = vmatprep.subr.mxu0 0.0
        %685 = vmatpush1.msra.mxu0 %v673
        %686 = vmatprep.subr.mxu0 0.0
        %687 = vmatpush1.msra.mxu0 %v674
        %688 = vmatprep.subr.mxu0 0.0
        %689 = vmatpush1.msra.mxu0 %v675
        %690 = vmatprep.subr.mxu0 0.0
        %691 = vmatpush1.msra.mxu0 %v676
        %692 = vmatprep.subr.mxu0 0.0
        %693 = vmatpush1.msra.mxu0 0.0
        %694 = vmatprep.subr.mxu0 0.0
        %695 = vmatpush1.msra.mxu0 0.0
        %696 = vmatprep.subr.mxu0 0.0
        %697 = vmatpush1.msra.mxu0 0.0
        %698 = vmatprep.subr.mxu0 0.0
        %699 = vmatpush1.msra.mxu0 0.0
        %700 = vmatprep.subr.mxu0 0.0
        %701 = vmatpush1.msra.mxu0 0.0
        %702 = vmatprep.subr.mxu0 0.0
        %703 = vmatpush1.msra.mxu0 0.0
        %704 = vmatprep.subr.mxu0 0.0
        %705 = vmatpush1.msra.mxu0 0.0
        %706 = vmatprep.subr.mxu0 0.0
        %707 = vmatpush1.msra.mxu0 0.0
        %708 = vmatprep.subr.mxu0 0.0
        %709 = vmatpush1.msra.mxu0 0.0
        %710 = vmatprep.subr.mxu0 0.0
        %711 = vmatpush1.msra.mxu0 0.0
        %712 = vmatprep.subr.mxu0 0.0
        %713 = vmatpush1.msra.mxu0 0.0
        %714 = vmatprep.subr.mxu0 0.0
        %715 = vmatpush1.msra.mxu0 0.0
        %716 = vmatprep.subr.mxu0 0.0
        %717 = vmatpush1.msra.mxu0 0.0
        %718 = vmatprep.subr.mxu0 0.0
        %719 = vmatpush1.msra.mxu0 0.0
        %720 = vmatprep.subr.mxu0 0.0
        %721 = vmatpush1.msra.mxu0 0.0
        %722 = vmatprep.subr.mxu0 0.0
        %723 = vmatpush1.msra.mxu0 0.0
        %724 = vmatprep.subr.mxu0 0.0
        %725 = vmatpush1.msra.mxu0 0.0
        %726 = vmatprep.subr.mxu0 0.0
        %727 = vmatpush1.msra.mxu0 0.0
        %728 = vmatprep.subr.mxu0 0.0
        %729 = vmatpush1.msra.mxu0 0.0
        %730 = vmatprep.subr.mxu0 0.0
        %731 = vmatpush1.msra.mxu0 0.0
        %732 = vmatprep.subr.mxu0 0.0
        %733 = vmatpush1.msra.mxu0 0.0
        %734 = vmatprep.subr.mxu0 0.0
        %735 = vmatpush1.msra.mxu0 0.0
        %736 = vmatprep.subr.mxu0 0.0
        %737 = vmatpush1.msra.mxu0 0.0
        %738 = vmatprep.subr.mxu0 0.0
        %739 = vmatpush1.msra.mxu0 0.0
        %740 = vmatprep.subr.mxu0 0.0
        %741 = vmatpush1.msra.mxu0 0.0
        %742 = vmatprep.subr.mxu0 0.0
        %743 = vmatpush1.msra.mxu0 0.0
        %744 = vmatprep.subr.mxu0 0.0
        %745 = vmatpush1.msra.mxu0 0.0
        %746 = vmatprep.subr.mxu0 0.0
        %747 = vmatpush1.msra.mxu0 0.0
        %748 = vmatprep.mubr.f32.mxu0 0.0
        %749 = vmatmul.mubr.f32.gmra.mrb[0].mxu0 %v679
        %v750 = vpop.f32.mrb[0].mxu0
        %v751 = vadd.f32 0.0, %v750
        %v752 = vpop.f32.mrb[0].mxu0
        %753 = vmatprep.mubr.f32.mxu0 0.0
        %754 = vmatmul.mubr.f32.gmra.mrb[0].mxu0 %v682
        %v755 = vpop.f32.mrb[0].mxu0
        %v756 = vadd.f32 0.0, %v755
        %v757 = vpop.f32.mrb[0].mxu0
        %758 = vdwg.mxu0
        %v759 = vadd.f32 %v441, %v751
        %v760 = vadd.f32 %v442, %v756
        %v761 = vadd.f32 %v759, %v426
        %v762 = vadd.f32 %v760, %v431
        %763 = vst.msk [vmem:[#allocation2] sm:$0xff] %vm527, %v761
        %764 = vst.msk [vmem:[#allocation2 + $0x8] sm:$0xff] %vm527, %v762
        %v765 = vld [vmem:[%s383 + $0x10] sm:$0xff]
        %v766 = vld [vmem:[%s383 + $0x18] sm:$0xff]
        %s767 = scalar_lea.vmem %s377, 16
        %v768 = vld [vmem:[%s767] sm:$0xff]
        %v769 = vld [vmem:[%s767 + $0x8] sm:$0xff]
        %v771 = vsel %vm445, %v768, 0
        %v774 = vsel %vm445, %v769, 0
        %776 = vmatprep.subr.mxu0 0.0
        %777 = vmatpush1.msra.mxu0 %v765
        %778 = vmatprep.subr.mxu0 0.0
        %779 = vmatpush1.msra.mxu0 %v766
        %780 = vmatprep.subr.mxu0 0.0
        %781 = vmatpush1.msra.mxu0 0.0
        %782 = vmatprep.subr.mxu0 0.0
        %783 = vmatpush1.msra.mxu0 0.0
        %784 = vmatprep.subr.mxu0 0.0
        %785 = vmatpush1.msra.mxu0 0.0
        %786 = vmatprep.subr.mxu0 0.0
        %787 = vmatpush1.msra.mxu0 0.0
        %788 = vmatprep.subr.mxu0 0.0
        %789 = vmatpush1.msra.mxu0 0.0
        %790 = vmatprep.subr.mxu0 0.0
        %791 = vmatpush1.msra.mxu0 0.0
        %792 = vmatprep.subr.mxu0 0.0
        %793 = vmatpush1.msra.mxu0 0.0
        %794 = vmatprep.subr.mxu0 0.0
        %795 = vmatpush1.msra.mxu0 0.0
        %796 = vmatprep.subr.mxu0 0.0
        %797 = vmatpush1.msra.mxu0 0.0
        %798 = vmatprep.subr.mxu0 0.0
        %799 = vmatpush1.msra.mxu0 0.0
        %800 = vmatprep.subr.mxu0 0.0
        %801 = vmatpush1.msra.mxu0 0.0
        %802 = vmatprep.subr.mxu0 0.0
        %803 = vmatpush1.msra.mxu0 0.0
        %804 = vmatprep.subr.mxu0 0.0
        %805 = vmatpush1.msra.mxu0 0.0
        %806 = vmatprep.subr.mxu0 0.0
        %807 = vmatpush1.msra.mxu0 0.0
        %808 = vmatprep.subr.mxu0 0.0
        %809 = vmatpush1.msra.mxu0 0.0
        %810 = vmatprep.subr.mxu0 0.0
        %811 = vmatpush1.msra.mxu0 0.0
        %812 = vmatprep.subr.mxu0 0.0
        %813 = vmatpush1.msra.mxu0 0.0
        %814 = vmatprep.subr.mxu0 0.0
        %815 = vmatpush1.msra.mxu0 0.0
        %816 = vmatprep.subr.mxu0 0.0
        %817 = vmatpush1.msra.mxu0 0.0
        %818 = vmatprep.subr.mxu0 0.0
        %819 = vmatpush1.msra.mxu0 0.0
        %820 = vmatprep.subr.mxu0 0.0
        %821 = vmatpush1.msra.mxu0 0.0
        %822 = vmatprep.subr.mxu0 0.0
        %823 = vmatpush1.msra.mxu0 0.0
        %824 = vmatprep.subr.mxu0 0.0
        %825 = vmatpush1.msra.mxu0 0.0
        %826 = vmatprep.subr.mxu0 0.0
        %827 = vmatpush1.msra.mxu0 0.0
        %828 = vmatprep.subr.mxu0 0.0
        %829 = vmatpush1.msra.mxu0 0.0
        %830 = vmatprep.subr.mxu0 0.0
        %831 = vmatpush1.msra.mxu0 0.0
        %832 = vmatprep.subr.mxu0 0.0
        %833 = vmatpush1.msra.mxu0 0.0
        %834 = vmatprep.subr.mxu0 0.0
        %835 = vmatpush1.msra.mxu0 0.0
        %836 = vmatprep.subr.mxu0 0.0
        %837 = vmatpush1.msra.mxu0 0.0
        %838 = vmatprep.subr.mxu0 0.0
        %839 = vmatpush1.msra.mxu0 0.0
        %840 = vmatprep.mubr.f32.mxu0 0.0
        %841 = vmatmul.mubr.f32.gmra.mrb[0].mxu0 %v771
        %v842 = vpop.f32.mrb[0].mxu0
        %v843 = vadd.f32 0.0, %v842
        %v844 = vpop.f32.mrb[0].mxu0
        %845 = vmatprep.mubr.f32.mxu0 0.0
        %846 = vmatmul.mubr.f32.gmra.mrb[0].mxu0 %v774
        %v847 = vpop.f32.mrb[0].mxu0
        %v848 = vadd.f32 0.0, %v847
        %v849 = vpop.f32.mrb[0].mxu0
        %850 = vdwg.mxu0
        %v851 = vsel %vm527, %v843, 0.0
        %852 = vadd.xlane.f32.xlu0 %v851
        %v853 = vpop.xlane.xlu0 %852
        %v854 = vsel %vm527, %v848, 0.0
        %855 = vadd.xlane.f32.xlu0 %v854
        %v856 = vpop.xlane.xlu0 %855
        %v857 = vmul.f32 %v853, %v534
        %v858 = vmul.f32 %v856, %v534
        %v859 = vsub.f32 %v843, %v857
        %v860 = vsub.f32 %v848, %v858
        %v861 = vmul.f32 %v859, %v859
        %v862 = vmul.f32 %v860, %v860
        %v863 = vsel %vm527, %v861, 0.0
        %864 = vadd.xlane.f32.xlu0 %v863
        %v865 = vpop.xlane.xlu0 %864
        %v866 = vsel %vm527, %v862, 0.0
        %867 = vadd.xlane.f32.xlu0 %v866
        %v868 = vpop.xlane.xlu0 %867
        %v869 = vmul.f32 %v865, %v534
        %v870 = vmul.f32 %v868, %v534
        %v871 = vadd.f32 %v869, 1e-05
        %v872 = vadd.f32 %v870, 1e-05
        %v873 = vrsqrt.pop %v871
        %v874 = vrsqrt.pop %v872
        %v875 = vmul.f32 %v859, %v873
        %v876 = vmul.f32 %v860, %v874
        %v877 = vmul.f32 %v875, %v436
        %v878 = vmul.f32 %v876, %v436
        %v879 = vadd.f32 %v877, %v440
        %v880 = vadd.f32 %v878, %v440
        %881 = vmatprep.subr.mxu0 0.0
        %882 = vmatpush1.msra.mxu0 %v879
        %883 = vmatprep.subr.mxu0 0.0
        %884 = vmatpush1.msra.mxu0 %v880
        %885 = vmatprep.subr.mxu0 0.0
        %886 = vmatpush1.msra.mxu0 0.0
        %887 = vmatprep.subr.mxu0 0.0
        %888 = vmatpush1.msra.mxu0 0.0
        %889 = vmatprep.subr.mxu0 0.0
        %890 = vmatpush1.msra.mxu0 0.0
        %891 = vmatprep.subr.mxu0 0.0
        %892 = vmatpush1.msra.mxu0 0.0
        %893 = vmatprep.subr.mxu0 0.0
        %894 = vmatpush1.msra.mxu0 0.0
        %895 = vmatprep.subr.mxu0 0.0
        %896 = vmatpush1.msra.mxu0 0.0
        %897 = vmatprep.subr.mxu0 0.0
        %898 = vmatpush1.msra.mxu0 0.0
        %899 = vmatprep.subr.mxu0 0.0
        %900 = vmatpush1.msra.mxu0 0.0
        %901 = vmatprep.subr.mxu0 0.0
        %902 = vmatpush1.msra.mxu0 0.0
        %903 = vmatprep.subr.mxu0 0.0
        %904 = vmatpush1.msra.mxu0 0.0
        %905 = vmatprep.subr.mxu0 0.0
        %906 = vmatpush1.msra.mxu0 0.0
        %907 = vmatprep.subr.mxu0 0.0
        %908 = vmatpush1.msra.mxu0 0.0
        %909 = vmatprep.subr.mxu0 0.0
        %910 = vmatpush1.msra.mxu0 0.0
        %911 = vmatprep.subr.mxu0 0.0
        %912 = vmatpush1.msra.mxu0 0.0
        %913 = vmatprep.subr.mxu0 0.0
        %914 = vmatpush1.msra.mxu0 0.0
        %915 = vmatprep.subr.mxu0 0.0
        %916 = vmatpush1.msra.mxu0 0.0
        %917 = vmatprep.subr.mxu0 0.0
        %918 = vmatpush1.msra.mxu0 0.0
        %919 = vmatprep.subr.mxu0 0.0
        %920 = vmatpush1.msra.mxu0 0.0
        %921 = vmatprep.subr.mxu0 0.0
        %922 = vmatpush1.msra.mxu0 0.0
        %923 = vmatprep.subr.mxu0 0.0
        %924 = vmatpush1.msra.mxu0 0.0
        %925 = vmatprep.subr.mxu0 0.0
        %926 = vmatpush1.msra.mxu0 0.0
        %927 = vmatprep.subr.mxu0 0.0
        %928 = vmatpush1.msra.mxu0 0.0
        %929 = vmatprep.subr.mxu0 0.0
        %930 = vmatpush1.msra.mxu0 0.0
        %931 = vmatprep.subr.mxu0 0.0
        %932 = vmatpush1.msra.mxu0 0.0
        %933 = vmatprep.subr.mxu0 0.0
        %934 = vmatpush1.msra.mxu0 0.0
        %935 = vmatprep.subr.mxu0 0.0
        %936 = vmatpush1.msra.mxu0 0.0
        %937 = vmatprep.subr.mxu0 0.0
        %938 = vmatpush1.msra.mxu0 0.0
        %939 = vmatprep.subr.mxu0 0.0
        %940 = vmatpush1.msra.mxu0 0.0
        %941 = vmatprep.subr.mxu0 0.0
        %942 = vmatpush1.msra.mxu0 0.0
        %943 = vmatprep.subr.mxu0 0.0
        %944 = vmatpush1.msra.mxu0 0.0
        %945 = vmatprep.mubr.f32.mxu0 0.0
        %946 = vmatmul.mubr.f32.gmra.mrb[0].mxu0 %v560
        %v947 = vpop.f32.mrb[0].mxu0
        %v948 = vadd.f32 %v404, %v947
        %v949 = vpop.f32.mrb[0].mxu0
        %950 = vmatprep.mubr.f32.mxu0 0.0
        %951 = vmatmul.mubr.f32.gmra.mrb[0].mxu0 %v563
        %v952 = vpop.f32.mrb[0].mxu0
        %v953 = vadd.f32 %v409, %v952
        %v954 = vpop.f32.mrb[0].mxu0
        %955 = vmatprep.mubr.f32.mxu0 0.0
        %956 = vmatmul.mubr.f32.gmra.mrb[0].mxu0 %v566
        %v957 = vpop.f32.mrb[0].mxu0
        %v958 = vadd.f32 %v414, %v957
        %v959 = vpop.f32.mrb[0].mxu0
        %960 = vmatprep.mubr.f32.mxu0 0.0
        %961 = vmatmul.mubr.f32.gmra.mrb[0].mxu0 %v569
        %v962 = vpop.f32.mrb[0].mxu0
        %v963 = vadd.f32 %v419, %v962
        %v964 = vpop.f32.mrb[0].mxu0
        %965 = vdwg.mxu0
        %v966 = vmul.f32 %v948, 0.5
        %v967 = vmul.f32 %v953, 0.5
        %v968 = vmul.f32 %v958, 0.5
        %v969 = vmul.f32 %v963, 0.5
        %v970 = vmul.f32 %v948, %v660
        %v971 = vmul.f32 %v953, %v660
        %v972 = vmul.f32 %v958, %v660
        %v973 = vmul.f32 %v963, %v660
        %v974 = verf.f32.pop %v970
        %v975 = verf.f32.pop %v971
        %v976 = verf.f32.pop %v972
        %v977 = verf.f32.pop %v973
        %v978 = vadd.f32 %v974, 1.0
        %v979 = vadd.f32 %v975, 1.0
        %v980 = vadd.f32 %v976, 1.0
        %v981 = vadd.f32 %v977, 1.0
        %v982 = vmul.f32 %v966, %v978
        %v983 = vmul.f32 %v967, %v979
        %v984 = vmul.f32 %v968, %v980
        %v985 = vmul.f32 %v969, %v981
        %986 = vmatprep.subr.mxu0 0.0
        %987 = vmatpush1.msra.mxu0 %v982
        %988 = vmatprep.subr.mxu0 0.0
        %989 = vmatpush1.msra.mxu0 %v983
        %990 = vmatprep.subr.mxu0 0.0
        %991 = vmatpush1.msra.mxu0 %v984
        %992 = vmatprep.subr.mxu0 0.0
        %993 = vmatpush1.msra.mxu0 %v985
        %994 = vmatprep.subr.mxu0 0.0
        %995 = vmatpush1.msra.mxu0 0.0
        %996 = vmatprep.subr.mxu0 0.0
        %997 = vmatpush1.msra.mxu0 0.0
        %998 = vmatprep.subr.mxu0 0.0
        %999 = vmatpush1.msra.mxu0 0.0
        %1000 = vmatprep.subr.mxu0 0.0
        %1001 = vmatpush1.msra.mxu0 0.0
        %1002 = vmatprep.subr.mxu0 0.0
        %1003 = vmatpush1.msra.mxu0 0.0
        %1004 = vmatprep.subr.mxu0 0.0
        %1005 = vmatpush1.msra.mxu0 0.0
        %1006 = vmatprep.subr.mxu0 0.0
        %1007 = vmatpush1.msra.mxu0 0.0
        %1008 = vmatprep.subr.mxu0 0.0
        %1009 = vmatpush1.msra.mxu0 0.0
        %1010 = vmatprep.subr.mxu0 0.0
        %1011 = vmatpush1.msra.mxu0 0.0
        %1012 = vmatprep.subr.mxu0 0.0
        %1013 = vmatpush1.msra.mxu0 0.0
        %1014 = vmatprep.subr.mxu0 0.0
        %1015 = vmatpush1.msra.mxu0 0.0
        %1016 = vmatprep.subr.mxu0 0.0
        %1017 = vmatpush1.msra.mxu0 0.0
        %1018 = vmatprep.subr.mxu0 0.0
        %1019 = vmatpush1.msra.mxu0 0.0
        %1020 = vmatprep.subr.mxu0 0.0
        %1021 = vmatpush1.msra.mxu0 0.0
        %1022 = vmatprep.subr.mxu0 0.0
        %1023 = vmatpush1.msra.mxu0 0.0
        %1024 = vmatprep.subr.mxu0 0.0
        %1025 = vmatpush1.msra.mxu0 0.0
        %1026 = vmatprep.subr.mxu0 0.0
        %1027 = vmatpush1.msra.mxu0 0.0
        %1028 = vmatprep.subr.mxu0 0.0
        %1029 = vmatpush1.msra.mxu0 0.0
        %1030 = vmatprep.subr.mxu0 0.0
        %1031 = vmatpush1.msra.mxu0 0.0
        %1032 = vmatprep.subr.mxu0 0.0
        %1033 = vmatpush1.msra.mxu0 0.0
        %1034 = vmatprep.subr.mxu0 0.0
        %1035 = vmatpush1.msra.mxu0 0.0
        %1036 = vmatprep.subr.mxu0 0.0
        %1037 = vmatpush1.msra.mxu0 0.0
        %1038 = vmatprep.subr.mxu0 0.0
        %1039 = vmatpush1.msra.mxu0 0.0
        %1040 = vmatprep.subr.mxu0 0.0
        %1041 = vmatpush1.msra.mxu0 0.0
        %1042 = vmatprep.subr.mxu0 0.0
        %1043 = vmatpush1.msra.mxu0 0.0
        %1044 = vmatprep.subr.mxu0 0.0
        %1045 = vmatpush1.msra.mxu0 0.0
        %1046 = vmatprep.subr.mxu0 0.0
        %1047 = vmatpush1.msra.mxu0 0.0
        %1048 = vmatprep.subr.mxu0 0.0
        %1049 = vmatpush1.msra.mxu0 0.0
        %1050 = vmatprep.mubr.f32.mxu0 0.0
        %1051 = vmatmul.mubr.f32.gmra.mrb[0].mxu0 %v679
        %v1052 = vpop.f32.mrb[0].mxu0
        %v1053 = vadd.f32 0.0, %v1052
        %v1054 = vpop.f32.mrb[0].mxu0
        %1055 = vmatprep.mubr.f32.mxu0 0.0
        %1056 = vmatmul.mubr.f32.gmra.mrb[0].mxu0 %v682
        %v1057 = vpop.f32.mrb[0].mxu0
        %v1058 = vadd.f32 0.0, %v1057
        %v1059 = vpop.f32.mrb[0].mxu0
        %1060 = vdwg.mxu0
        %v1061 = vadd.f32 %v765, %v1053
        %v1062 = vadd.f32 %v766, %v1058
        %v1063 = vadd.f32 %v1061, %v426
        %v1064 = vadd.f32 %v1062, %v431
        %1065 = vst.msk [vmem:[#allocation2 + $0x10] sm:$0xff] %vm527, %v1063
        %1066 = vst.msk [vmem:[#allocation2 + $0x18] sm:$0xff] %vm527, %v1064
        %v1067 = vld [vmem:[#allocation2] sm:$0xff]
        %v1068 = vld [vmem:[#allocation2 + $0x8] sm:$0xff]
        %v1069 = vld [vmem:[#allocation2 + $0x10] sm:$0xff]
        %v1070 = vld [vmem:[#allocation2 + $0x18] sm:$0xff]
        %v1071 = vsel %vm527, %v1067, 0.0
        %1072 = vadd.xlane.f32.xlu0 %v1071
        %v1073 = vpop.xlane.xlu0 %1072
        %v1074 = vsel %vm527, %v1068, 0.0
        %1075 = vadd.xlane.f32.xlu0 %v1074
        %v1076 = vpop.xlane.xlu0 %1075
        %v1077 = vsel %vm527, %v1069, 0.0
        %1078 = vadd.xlane.f32.xlu0 %v1077
        %v1079 = vpop.xlane.xlu0 %1078
        %v1080 = vsel %vm527, %v1070, 0.0
        %1081 = vadd.xlane.f32.xlu0 %v1080
        %v1082 = vpop.xlane.xlu0 %1081
        %v1083 = vmul.f32 %v1073, %v534
        %v1084 = vmul.f32 %v1076, %v534
        %v1085 = vmul.f32 %v1079, %v534
        %v1086 = vmul.f32 %v1082, %v534
        %v1087 = vsub.f32 %v1067, %v1083
        %v1088 = vsub.f32 %v1068, %v1084
        %v1089 = vsub.f32 %v1069, %v1085
        %v1090 = vsub.f32 %v1070, %v1086
        %v1091 = vmul.f32 %v1087, %v1087
        %v1092 = vmul.f32 %v1088, %v1088
        %v1093 = vmul.f32 %v1089, %v1089
        %v1094 = vmul.f32 %v1090, %v1090
        %v1095 = vsel %vm527, %v1091, 0.0
        %1096 = vadd.xlane.f32.xlu0 %v1095
        %v1097 = vpop.xlane.xlu0 %1096
        %v1098 = vsel %vm527, %v1092, 0.0
        %1099 = vadd.xlane.f32.xlu0 %v1098
        %v1100 = vpop.xlane.xlu0 %1099
        %v1101 = vsel %vm527, %v1093, 0.0
        %1102 = vadd.xlane.f32.xlu0 %v1101
        %v1103 = vpop.xlane.xlu0 %1102
        %v1104 = vsel %vm527, %v1094, 0.0
        %1105 = vadd.xlane.f32.xlu0 %v1104
        %v1106 = vpop.xlane.xlu0 %1105
        %v1107 = vmul.f32 %v1097, %v534
        %v1108 = vmul.f32 %v1100, %v534
        %v1109 = vmul.f32 %v1103, %v534
        %v1110 = vmul.f32 %v1106, %v534
        %v1111 = vadd.f32 %v1107, 1e-05
        %v1112 = vadd.f32 %v1108, 1e-05
        %v1113 = vadd.f32 %v1109, 1e-05
        %v1114 = vadd.f32 %v1110, 1e-05
        %v1115 = vrsqrt.pop %v1111
        %v1116 = vrsqrt.pop %v1112
        %v1117 = vrsqrt.pop %v1113
        %v1118 = vrsqrt.pop %v1114
        %v1119 = vmul.f32 %v1087, %v1115
        %v1120 = vmul.f32 %v1088, %v1116
        %v1121 = vmul.f32 %v1089, %v1117
        %v1122 = vmul.f32 %v1090, %v1118
        %v1123 = vlaneseq
        %v1124 = vshrl.u32 %v1123, 7
        %v1125 = vsub.s32 0, %v1124
        %v1126 = vrot.slane %v388, %v1125
        %v1127 = vmul.f32 %v1119, %v1126
        %v1128 = vmul.f32 %v1120, %v1126
        %v1129 = vmul.f32 %v1121, %v1126
        %v1130 = vmul.f32 %v1122, %v1126
        %v1131 = vlaneseq
        %v1132 = vshrl.u32 %v1131, 7
        %v1133 = vsub.s32 0, %v1132
        %v1134 = vrot.slane %v389, %v1133
        %v1135 = vadd.f32 %v1127, %v1134
        %v1136 = vadd.f32 %v1128, %v1134
        %v1137 = vadd.f32 %v1129, %v1134
        %v1138 = vadd.f32 %v1130, %v1134
        %v1139 = vld [vmem:[%s7] sm:$0xff]
        %v1140 = vld [vmem:[%s7 + $0x8] sm:$0xff]
        %v1141 = vld [vmem:[%s7 + $0x10] sm:$0xff]
        %v1142 = vld [vmem:[%s7 + $0x18] sm:$0xff]
        %v1143 = vld [vmem:[%s7 + $0x20] sm:$0xff]
        %v1144 = vld [vmem:[%s7 + $0x28] sm:$0xff]
        %v1145 = vld [vmem:[%s7 + $0x30] sm:$0xff]
        %v1146 = vld [vmem:[%s7 + $0x38] sm:$0xff]
        %v1147 = vld [vmem:[%s8] sm:$0x1]
        %v1149 = vlaneseq
        %v1150 = vshrl.u32 %v1149, 7
        %v1151 = vsub.s32 0, %v1150
        %v1152 = vrot.slane %v1147, %v1151
        %v1155 = vsel %vm527, %v1135, 0
        %v1158 = vsel %vm527, %v1136, 0
        %v1161 = vsel %vm527, %v1137, 0
        %v1164 = vsel %vm527, %v1138, 0
        %1166 = vmatprep.subr.mxu0 0.0
        %1167 = vmatpush1.msra.mxu0 %v1139
        %1168 = vmatprep.subr.mxu0 0.0
        %1169 = vmatpush1.msra.mxu0 %v1140
        %1170 = vmatprep.subr.mxu0 0.0
        %1171 = vmatpush1.msra.mxu0 %v1141
        %1172 = vmatprep.subr.mxu0 0.0
        %1173 = vmatpush1.msra.mxu0 %v1142
        %1174 = vmatprep.subr.mxu0 0.0
        %1175 = vmatpush1.msra.mxu0 %v1143
        %1176 = vmatprep.subr.mxu0 0.0
        %1177 = vmatpush1.msra.mxu0 %v1144
        %1178 = vmatprep.subr.mxu0 0.0
        %1179 = vmatpush1.msra.mxu0 %v1145
        %1180 = vmatprep.subr.mxu0 0.0
        %1181 = vmatpush1.msra.mxu0 %v1146
        %1182 = vmatprep.subr.mxu0 0.0
        %1183 = vmatpush1.msra.mxu0 0.0
        %1184 = vmatprep.subr.mxu0 0.0
        %1185 = vmatpush1.msra.mxu0 0.0
        %1186 = vmatprep.subr.mxu0 0.0
        %1187 = vmatpush1.msra.mxu0 0.0
        %1188 = vmatprep.subr.mxu0 0.0
        %1189 = vmatpush1.msra.mxu0 0.0
        %1190 = vmatprep.subr.mxu0 0.0
        %1191 = vmatpush1.msra.mxu0 0.0
        %1192 = vmatprep.subr.mxu0 0.0
        %1193 = vmatpush1.msra.mxu0 0.0
        %1194 = vmatprep.subr.mxu0 0.0
        %1195 = vmatpush1.msra.mxu0 0.0
        %1196 = vmatprep.subr.mxu0 0.0
        %1197 = vmatpush1.msra.mxu0 0.0
        %1198 = vmatprep.subr.mxu0 0.0
        %1199 = vmatpush1.msra.mxu0 0.0
        %1200 = vmatprep.subr.mxu0 0.0
        %1201 = vmatpush1.msra.mxu0 0.0
        %1202 = vmatprep.subr.mxu0 0.0
        %1203 = vmatpush1.msra.mxu0 0.0
        %1204 = vmatprep.subr.mxu0 0.0
        %1205 = vmatpush1.msra.mxu0 0.0
        %1206 = vmatprep.subr.mxu0 0.0
        %1207 = vmatpush1.msra.mxu0 0.0
        %1208 = vmatprep.subr.mxu0 0.0
        %1209 = vmatpush1.msra.mxu0 0.0
        %1210 = vmatprep.subr.mxu0 0.0
        %1211 = vmatpush1.msra.mxu0 0.0
        %1212 = vmatprep.subr.mxu0 0.0
        %1213 = vmatpush1.msra.mxu0 0.0
        %1214 = vmatprep.subr.mxu0 0.0
        %1215 = vmatpush1.msra.mxu0 0.0
        %1216 = vmatprep.subr.mxu0 0.0
        %1217 = vmatpush1.msra.mxu0 0.0
        %1218 = vmatprep.subr.mxu0 0.0
        %1219 = vmatpush1.msra.mxu0 0.0
        %1220 = vmatprep.subr.mxu0 0.0
        %1221 = vmatpush1.msra.mxu0 0.0
        %1222 = vmatprep.subr.mxu0 0.0
        %1223 = vmatpush1.msra.mxu0 0.0
        %1224 = vmatprep.subr.mxu0 0.0
        %1225 = vmatpush1.msra.mxu0 0.0
        %1226 = vmatprep.subr.mxu0 0.0
        %1227 = vmatpush1.msra.mxu0 0.0
        %1228 = vmatprep.subr.mxu0 0.0
        %1229 = vmatpush1.msra.mxu0 0.0
        %1230 = vmatprep.mubr.f32.mxu0 0.0
        %1231 = vmatmul.mubr.f32.gmra.mrb[0].mxu0 %v1155
        %v1232 = vpop.f32.mrb[0].mxu0
        %v1233 = vadd.f32 %v1152, %v1232
        %v1234 = vpop.f32.mrb[0].mxu0
        %1235 = vmatprep.mubr.f32.mxu0 0.0
        %1236 = vmatmul.mubr.f32.gmra.mrb[0].mxu0 %v1158
        %v1237 = vpop.f32.mrb[0].mxu0
        %v1238 = vadd.f32 %v1152, %v1237
        %v1239 = vpop.f32.mrb[0].mxu0
        %1240 = vmatprep.mubr.f32.mxu0 0.0
        %1241 = vmatmul.mubr.f32.gmra.mrb[0].mxu0 %v1161
        %v1242 = vpop.f32.mrb[0].mxu0
        %v1243 = vadd.f32 %v1152, %v1242
        %v1244 = vpop.f32.mrb[0].mxu0
        %1245 = vmatprep.mubr.f32.mxu0 0.0
        %1246 = vmatmul.mubr.f32.gmra.mrb[0].mxu0 %v1164
        %v1247 = vpop.f32.mrb[0].mxu0
        %v1248 = vadd.f32 %v1152, %v1247
        %v1249 = vpop.f32.mrb[0].mxu0
        %1250 = vdwg.mxu0
        %v1251 = vmul.f32 %v1233, 0.5
        %v1252 = vmul.f32 %v1238, 0.5
        %v1253 = vmul.f32 %v1243, 0.5
        %v1254 = vmul.f32 %v1248, 0.5
        %v1255 = vmul.f32 %v1233, %v660
        %v1256 = vmul.f32 %v1238, %v660
        %v1257 = vmul.f32 %v1243, %v660
        %v1258 = vmul.f32 %v1248, %v660
        %v1259 = verf.f32.pop %v1255
        %v1260 = verf.f32.pop %v1256
        %v1261 = verf.f32.pop %v1257
        %v1262 = verf.f32.pop %v1258
        %v1263 = vadd.f32 %v1259, 1.0
        %v1264 = vadd.f32 %v1260, 1.0
        %v1265 = vadd.f32 %v1261, 1.0
        %v1266 = vadd.f32 %v1262, 1.0
        %v1267 = vmul.f32 %v1251, %v1263
        %v1268 = vmul.f32 %v1252, %v1264
        %v1269 = vmul.f32 %v1253, %v1265
        %v1270 = vmul.f32 %v1254, %v1266
        %v1271 = vld [vmem:[%s9] sm:$0xff]
        %v1272 = vld [vmem:[%s9 + $0x8] sm:$0xff]
        %v1273 = vld [vmem:[%s9 + $0x10] sm:$0xff]
        %v1274 = vld [vmem:[%s9 + $0x18] sm:$0xff]
        %v1275 = vld [vmem:[%s9 + $0x20] sm:$0xff]
        %v1276 = vld [vmem:[%s9 + $0x28] sm:$0xff]
        %v1277 = vld [vmem:[%s9 + $0x30] sm:$0xff]
        %v1278 = vld [vmem:[%s9 + $0x38] sm:$0xff]
        %v1279 = vld [vmem:[%s9 + $0x40] sm:$0xff]
        %v1280 = vld [vmem:[%s9 + $0x48] sm:$0xff]
        %v1281 = vld [vmem:[%s9 + $0x50] sm:$0xff]
        %v1282 = vld [vmem:[%s9 + $0x58] sm:$0xff]
        %v1283 = vld [vmem:[%s9 + $0x60] sm:$0xff]
        %v1284 = vld [vmem:[%s9 + $0x68] sm:$0xff]
        %v1285 = vld [vmem:[%s9 + $0x70] sm:$0xff]
        %v1286 = vld [vmem:[%s9 + $0x78] sm:$0xff]
        %v1287 = vlaneseq
        %v1288 = vshrl.u32 %v1287, 7
        %v1289 = vsub.s32 0, %v1288
        %v1290 = vrot.slane %v390, %v1289
        %1291 = vmatprep.subr.mxu0 0.0
        %1292 = vmatpush1.msra.mxu0 %v1271
        %1293 = vmatprep.subr.mxu0 0.0
        %1294 = vmatpush1.msra.mxu0 %v1272
        %1295 = vmatprep.subr.mxu0 0.0
        %1296 = vmatpush1.msra.mxu0 %v1273
        %1297 = vmatprep.subr.mxu0 0.0
        %1298 = vmatpush1.msra.mxu0 %v1274
        %1299 = vmatprep.subr.mxu0 0.0
        %1300 = vmatpush1.msra.mxu0 %v1275
        %1301 = vmatprep.subr.mxu0 0.0
        %1302 = vmatpush1.msra.mxu0 %v1276
        %1303 = vmatprep.subr.mxu0 0.0
        %1304 = vmatpush1.msra.mxu0 %v1277
        %1305 = vmatprep.subr.mxu0 0.0
        %1306 = vmatpush1.msra.mxu0 %v1278
        %1307 = vmatprep.subr.mxu0 0.0
        %1308 = vmatpush1.msra.mxu0 %v1279
        %1309 = vmatprep.subr.mxu0 0.0
        %1310 = vmatpush1.msra.mxu0 %v1280
        %1311 = vmatprep.subr.mxu0 0.0
        %1312 = vmatpush1.msra.mxu0 %v1281
        %1313 = vmatprep.subr.mxu0 0.0
        %1314 = vmatpush1.msra.mxu0 %v1282
        %1315 = vmatprep.subr.mxu0 0.0
        %1316 = vmatpush1.msra.mxu0 %v1283
        %1317 = vmatprep.subr.mxu0 0.0
        %1318 = vmatpush1.msra.mxu0 %v1284
        %1319 = vmatprep.subr.mxu0 0.0
        %1320 = vmatpush1.msra.mxu0 %v1285
        %1321 = vmatprep.subr.mxu0 0.0
        %1322 = vmatpush1.msra.mxu0 %v1286
        %1323 = vmatprep.subr.mxu0 0.0
        %1324 = vmatpush1.msra.mxu0 0.0
        %1325 = vmatprep.subr.mxu0 0.0
        %1326 = vmatpush1.msra.mxu0 0.0
        %1327 = vmatprep.subr.mxu0 0.0
        %1328 = vmatpush1.msra.mxu0 0.0
        %1329 = vmatprep.subr.mxu0 0.0
        %1330 = vmatpush1.msra.mxu0 0.0
        %1331 = vmatprep.subr.mxu0 0.0
        %1332 = vmatpush1.msra.mxu0 0.0
        %1333 = vmatprep.subr.mxu0 0.0
        %1334 = vmatpush1.msra.mxu0 0.0
        %1335 = vmatprep.subr.mxu0 0.0
        %1336 = vmatpush1.msra.mxu0 0.0
        %1337 = vmatprep.subr.mxu0 0.0
        %1338 = vmatpush1.msra.mxu0 0.0
        %1339 = vmatprep.subr.mxu0 0.0
        %1340 = vmatpush1.msra.mxu0 0.0
        %1341 = vmatprep.subr.mxu0 0.0
        %1342 = vmatpush1.msra.mxu0 0.0
        %1343 = vmatprep.subr.mxu0 0.0
        %1344 = vmatpush1.msra.mxu0 0.0
        %1345 = vmatprep.subr.mxu0 0.0
        %1346 = vmatpush1.msra.mxu0 0.0
        %1347 = vmatprep.subr.mxu0 0.0
        %1348 = vmatpush1.msra.mxu0 0.0
        %1349 = vmatprep.subr.mxu0 0.0
        %1350 = vmatpush1.msra.mxu0 0.0
        %1351 = vmatprep.subr.mxu0 0.0
        %1352 = vmatpush1.msra.mxu0 0.0
        %1353 = vmatprep.subr.mxu0 0.0
        %1354 = vmatpush1.msra.mxu0 0.0
        %1355 = vmatprep.mubr.f32.mxu0 0.0
        %1356 = vmatmul.mubr.f32.gmra.mrb[0].mxu0 %v1267
        %v1357 = vpop.f32.mrb[0].mxu0
        %v1358 = vadd.f32 %v1290, %v1357
        %v1359 = vpop.f32.mrb[0].mxu0
        %1360 = vmatprep.mubr.f32.mxu0 0.0
        %1361 = vmatmul.mubr.f32.gmra.mrb[0].mxu0 %v1268
        %v1362 = vpop.f32.mrb[0].mxu0
        %v1363 = vadd.f32 %v1290, %v1362
        %v1364 = vpop.f32.mrb[0].mxu0
        %1365 = vmatprep.mubr.f32.mxu0 0.0
        %1366 = vmatmul.mubr.f32.gmra.mrb[0].mxu0 %v1269
        %v1367 = vpop.f32.mrb[0].mxu0
        %v1368 = vadd.f32 %v1290, %v1367
        %v1369 = vpop.f32.mrb[0].mxu0
        %1370 = vmatprep.mubr.f32.mxu0 0.0
        %1371 = vmatmul.mubr.f32.gmra.mrb[0].mxu0 %v1270
        %v1372 = vpop.f32.mrb[0].mxu0
        %v1373 = vadd.f32 %v1290, %v1372
        %v1374 = vpop.f32.mrb[0].mxu0
        %1375 = vdwg.mxu0
        %v1376 = vadd.f32 %v1067, %v1358
        %v1377 = vadd.f32 %v1068, %v1363
        %v1378 = vadd.f32 %v1069, %v1368
        %v1379 = vadd.f32 %v1070, %v1373
        %1380 = vst.msk [vmem:[%s371] sm:$0xff] %vm527, %v1376
        %1381 = vst.msk [vmem:[%s371 + $0x8] sm:$0xff] %vm527, %v1377
        %1382 = vst.msk [vmem:[%s371 + $0x10] sm:$0xff] %vm527, %v1378
        %1383 = vst.msk [vmem:[%s371 + $0x18] sm:$0xff] %vm527, %v1379
        %s1384 = sand.u32 %s252, 1
        %s1385 = scalar_lea.sflag [#allocation4], %s1384
        %s1386 = sand.u32 %s252, 1
        %s1387 = smul.addr %s1386, 32
        %s1388 = scalar_lea.vmem [#allocation3], %s1387
        // Predicated region
        $region61: #{mixer_block.1} parent=59 // pred_check
          %p1389 = pneg %p262
        $region62: #{mixer_block.1} parent=59 // pred_check_branch
          %1391 = sbr.rel (%p1389) target = $region64
        $region63: #{mixer_block.1} parent=59 // pred_region
          %s1392 = smul.u32 4, %s24
          %s1394 = ssub.s32 512, 512
          %1395 = vsyncadd %s1385, %s1394
          %s1396 = smul.addr %s1392, 128
          %s1397 = scalar_lea.hbm %s10, %s1396
          %s1398 = sshll.u32 %s1388, 4
          %s1399 = int_to_ptr.vmem [resolvable:$true] %s1398
          %1404 = dma.vmem_to_hbm [thread:$0]  %s1399, 512, %s1397, %s1385, 128, 128, 8
        $region64: #{mixer_block.1} parent=59 // pred_fallthru
          _
      $region60: #{mixer_block.1} parent=5 // pred_fallthru
        _
      %p1405 = scmp.le.s32.totalorder 2, %s19
      // Predicated region
      $region65: #{mixer_block.1} parent=5 // pred_check
        %p1406 = pneg %p1405
      $region66: #{mixer_block.1} parent=5 // pred_check_branch
        %1408 = sbr.rel (%p1406) target = $region68
      $region67: #{mixer_block.1} parent=5 // pred_region
        %s1409 = ssub.s32 %s19, 2
        // Predicated region
        $region69: #{mixer_block.1} parent=67 // pred_check
          %p1410 = pneg %p268
        $region70: #{mixer_block.1} parent=67 // pred_check_branch
          %1412 = sbr.rel (%p1410) target = $region72
        $region71: #{mixer_block.1} parent=67 // pred_region
          %s1413 = sand.u32 %s253, 1
          %s1414 = scalar_lea.sflag [#allocation4], %s1413
          %s1415 = sand.u32 %s253, 1
          %s1416 = smul.addr %s1415, 32
          %s1417 = scalar_lea.vmem [#allocation3], %s1416
          %1418 = dma.done %s1414, 512
        $region72: #{mixer_block.1} parent=67 // pred_fallthru
          _
      $region68: #{mixer_block.1} parent=5 // pred_fallthru
        _
    $region6: #{mixer_block.1} parent=1 // loop_footer
      %s23 = sadd.s32 1, %s19
    $region7: #{mixer_block.1} parent=1 // loop_footer_branch
      %18 = sbr.rel target = $region3
    $region8: #{mixer_block.1} parent=1 // loop_exit
      _
    %1419 = vsyncpa [#allocation4], 1
    %s1420 = scalar_lea.sflag [#allocation4], 1
    %1421 = vsyncpa %s1420, 1

</llo_original>
